<compile_context>
chip_gen: v7x
topology: tpu7x:2x2x1
jax: 0.10.0
libtpu: 0.0.40
codegen_flags: <defaults>
</compile_context>

<pallas_src>
import numpy as np
import jax
import jax.numpy as jnp
from jax.experimental import pallas as pl
from jax.experimental.pallas import tpu as pltpu  # noqa: F401  (TPU backend)

# ---------------- small, self-consistent configuration ----------------
SR         = 2000          # sample rate
N_FFT      = 64
WIN_LENGTH = 48
HOPSIZE    = 16
N_MELS     = 16
FMIN       = 0.0
FMAX       = 800.0
N_BINS     = N_FFT // 2 + 1          # 33
MAX_T      = 998                     # Passt.forward slices [:, :, :998]

CLASSES    = 8
EMBED      = 32
PATCH      = 4
FSTRIDE    = 4
TSTRIDE    = 4

B, C, T_AUDIO = 2, 1, 257            # (batch, in_channels, audio samples)

L_PRE    = T_AUDIO - 1               # 256 samples after pre-emphasis
N_FRAMES = L_PRE // HOPSIZE + 1      # 17 frames (torch.stft, center=True)
T_KEEP   = min(N_FRAMES, MAX_T)      # [:, :, :998] is a no-op at this size


def _round_up(x, m):
    return ((x + m - 1) // m) * m


FB  = N_FRAMES * N_BINS              # 561  flattened (frame, bin)
FBP = _round_up(FB, 128)             # 640  lane-aligned half width for re|im
FM  = N_FRAMES * N_MELS              # 272  flattened (frame, mel)
FMP = _round_up(FM, 128)             # 384


# ---------------------------- Pallas kernel ----------------------------
def passt_fused_kernel(x_ref, wri_ref, bd_ref, bw_ref, bb_ref, o_ref):
    # (B*C, T) @ (T, 2*FBP): pre-emphasis + reflect pad + framing + window + rDFT
    # (real part in cols [0, FBP), imag part in cols [FBP, 2*FBP); both halves
    # start on a 128-lane boundary so the slices below are vreg selections).
    ri = jnp.dot(x_ref[...], wri_ref[...], preferred_element_type=jnp.float32)
    re = ri[:, :FBP]
    im = ri[:, FBP:]
    power = re * re + im * im                          # pow(2).sum(-1), flattened (f, k)

    # block-diagonal kaldi mel filterbank: (B*C, FBP) @ (FBP, FMP) -> flat (f, m)
    mel = jnp.dot(power, bd_ref[...], preferred_element_type=jnp.float32)
    logmel = (jnp.log(mel + 1e-5) + 4.5) / 5.0         # log + affine (eval path)

    # folded stand-in backend: patch-embed + mean-pool + linear head == affine map
    o_ref[...] = (jnp.dot(logmel, bw_ref[...], preferred_element_type=jnp.float32)
                  + bb_ref[...])


# ---------------------- deterministic parameter setup ----------------------
def hann_window_symmetric(n):
    # torch.hann_window(n, periodic=False)
    k = np.arange(n, dtype=np.float64)
    return 0.5 * (1.0 - np.cos(2.0 * np.pi * k / (n - 1)))


def kaldi_mel_banks(num_bins, window_length_padded, sample_freq, low_freq, high_freq):
    # torchaudio.compliance.kaldi.get_mel_banks with vtln_warp_factor == 1.0
    num_fft_bins = window_length_padded // 2
    nyquist = 0.5 * sample_freq
    if high_freq <= 0.0:
        high_freq += nyquist
    fft_bin_width = sample_freq / window_length_padded

    def mel(f):
        return 1127.0 * np.log(1.0 + np.asarray(f, dtype=np.float64) / 700.0)

    mel_low, mel_high = mel(low_freq), mel(high_freq)
    mel_delta = (mel_high - mel_low) / (num_bins + 1)
    b = np.arange(num_bins, dtype=np.float64)[:, None]
    left = mel_low + b * mel_delta
    center = mel_low + (b + 1.0) * mel_delta
    right = mel_low + (b + 2.0) * mel_delta
    m = mel(fft_bin_width * np.arange(num_fft_bins, dtype=np.float64))[None, :]
    up = (m - left) / (center - left)
    down = (right - m) / (right - center)
    return np.maximum(0.0, np.minimum(up, down))                   # (n_mels, n_fft//2)


def build_params():
    # ---- windowed rDFT matrices (window padded to n_fft, centered) ----
    win = hann_window_symmetric(WIN_LENGTH)
    win_full = np.zeros(N_FFT, dtype=np.float64)
    lpad = (N_FFT - WIN_LENGTH) // 2
    win_full[lpad:lpad + WIN_LENGTH] = win

    n = np.arange(N_FFT, dtype=np.float64)
    k = np.arange(N_BINS, dtype=np.float64)
    ang = 2.0 * np.pi * np.outer(n, k) / N_FFT
    wr = win_full[:, None] * np.cos(ang)                            # (n_fft, n_bins)
    wi = win_full[:, None] * (-np.sin(ang))

    # ---- reflect-pad index map (torch.stft center=True, pad_mode='reflect') ----
    pad = N_FFT // 2
    j = np.arange(L_PRE + 2 * pad)
    idx = j - pad
    idx = np.where(idx < 0, -idx, idx)
    idx = np.where(idx >= L_PRE, 2 * (L_PRE - 1) - idx, idx)        # (320,)

    # ---- fold reflect pad + framing + window + rDFT: (L_PRE, FB) ----
    Ar = np.zeros((L_PRE, FB), dtype=np.float64)
    Ai = np.zeros((L_PRE, FB), dtype=np.float64)
    for f in range(N_FRAMES):
        src = idx[f * HOPSIZE:f * HOPSIZE + N_FFT]
        cols = slice(f * N_BINS, (f + 1) * N_BINS)
        for nn in range(N_FFT):
            Ar[src[nn], cols] += wr[nn]
            Ai[src[nn], cols] += wi[nn]

    # ---- fold pre-emphasis conv1d([-0.97, 1], valid): pre[t] = x[t+1] - 0.97*x[t] ----
    P = np.zeros((T_AUDIO, L_PRE), dtype=np.float64)
    P[np.arange(L_PRE), np.arange(L_PRE)] = -0.97
    P[np.arange(L_PRE) + 1, np.arange(L_PRE)] = 1.0

    Wri = np.zeros((T_AUDIO, 2 * FBP), dtype=np.float64)            # real | imag
    Wri[:, :FB] = P @ Ar
    Wri[:, FBP:FBP + FB] = P @ Ai

    # ---- kaldi mel banks (n_mels, n_fft//2) + zero column -> (n_mels, n_bins) ----
    mel_basis = kaldi_mel_banks(N_MELS, N_FFT, SR, FMIN, FMAX)
    mel_basis = np.pad(mel_basis, ((0, 0), (0, 1)))
    melT = mel_basis.T                                              # (n_bins, n_mels)

    # block-diagonal mel map: flattened (frame, bin) -> flattened (frame, mel)
    BD = np.zeros((FBP, FMP), dtype=np.float64)
    for f in range(N_FRAMES):
        BD[f * N_BINS:(f + 1) * N_BINS, f * N_MELS:(f + 1) * N_MELS] = melT

    # ---- deterministic stand-in backend weights ----
    # TODO(synk): real hear21passt ViT backend not available; linear stand-in.
    key = jax.random.PRNGKey(0)
    k1, k2 = jax.random.split(key)
    D = C * PATCH * PATCH
    patch_w = np.asarray(jax.random.normal(k1, (D, EMBED), jnp.float32),
                         dtype=np.float64) * 0.02
    patch_b = np.zeros((1, EMBED), dtype=np.float64)
    head_w = np.asarray(jax.random.normal(k2, (EMBED, CLASSES), jnp.float32),
                        dtype=np.float64) * 0.02
    head_b = np.zeros((1, CLASSES), dtype=np.float64)

    # Fold 4x4 / stride-4 (non-overlapping, VALID) patch extraction + patch-embed
    # + mean-pool into one linear map G over the flattened (frame, mel) log-mel.
    # spec[b, 0, m, f] = logmel[b, f*N_MELS + m]; frame 16 is dropped by VALID.
    n_pf = (N_MELS - PATCH) // FSTRIDE + 1          # 4
    n_pt = (T_KEEP - PATCH) // TSTRIDE + 1          # 4
    n_patches = n_pf * n_pt                         # 16
    G = np.zeros((FMP, EMBED), dtype=np.float64)
    for fi in range(n_pf):
        for ti in range(n_pt):
            for pf in range(PATCH):
                for pt in range(PATCH):
                    m = fi * FSTRIDE + pf
                    f = ti * TSTRIDE + pt
                    d = pf * PATCH + pt
                    G[f * N_MELS + m, :] += patch_w[d, :] / n_patches
    bw = G @ head_w                                  # (FMP, CLASSES)
    bb = patch_b @ head_w + head_b                   # (1, CLASSES)

    return dict(
        wri=jnp.asarray(Wri, jnp.float32),           # (257, 1280) ~1.3 MB
        bd=jnp.asarray(BD, jnp.float32),             # (640, 384)  ~1.0 MB
        bw=jnp.asarray(bw, jnp.float32),             # (384, 8)
        bb=jnp.asarray(bb, jnp.float32),             # (1, 8)
    )


# ------------------------------ forward pass ------------------------------
def passt_forward(x, params):
    # Passt.forward: x.reshape(-1, T); backend fold assumes C == 1 (config).
    Bb, Cc, T = x.shape
    xf = x.reshape(Bb * Cc, T)
    # Single fused pallas_call, no grid: all operands are whole-array VMEM
    # blocks (everything fits comfortably under the scoped VMEM limit).
    logits = pl.pallas_call(
        passt_fused_kernel,
        out_shape=jax.ShapeDtypeStruct((Bb * Cc, CLASSES), jnp.float32),
    )(xf, params["wri"], params["bd"], params["bw"], params["bb"])
    return logits                                    # (B, CLASSES) since C == 1


if __name__ == "__main__":
    params = build_params()
    key = jax.random.PRNGKey(0)
    x = jax.random.normal(key, (B, C, T_AUDIO), jnp.float32)        # audio batch

    fwd = jax.jit(passt_forward)
    out = jax.block_until_ready(fwd(x, params))
    assert out.shape == (B, CLASSES) and out.dtype == jnp.float32
    assert bool(jnp.all(jnp.isfinite(out)))
    print("KERNEL_OK")
</pallas_src>

<mosaic_0001>
module attributes {stable_mosaic.version = 11 : i64} {
  func.func @passt_fused_kernel(%arg0: memref<2x257xf32, #tpu.memory_space<vmem>>, %arg1: memref<257x1280xf32, #tpu.memory_space<vmem>>, %arg2: memref<640x384xf32, #tpu.memory_space<vmem>>, %arg3: memref<384x8xf32, #tpu.memory_space<vmem>>, %arg4: memref<1x8xf32, #tpu.memory_space<vmem>>, %arg5: memref<2x8xf32, #tpu.memory_space<vmem>>) attributes {dimension_semantics = [], scalar_prefetch = 0 : i64, scratch_operands = 0 : i64, tpu.core_type = #tpu.core_type<tc>} {
    %c0 = arith.constant 0 : index
    %c0_0 = arith.constant 0 : index
    %0 = vector.load %arg0[%c0, %c0_0] : memref<2x257xf32, #tpu.memory_space<vmem>>, vector<2x257xf32>
    %c0_1 = arith.constant 0 : index
    %c0_2 = arith.constant 0 : index
    %1 = vector.load %arg1[%c0_1, %c0_2] : memref<257x1280xf32, #tpu.memory_space<vmem>>, vector<257x1280xf32>
    %cst = arith.constant dense<0.000000e+00> : vector<2x1280xf32>
    %2 = tpu.matmul %0, %1, %cst {dimension_numbers = #tpu.dot_dimension_numbers<[1], [0], [0], [1], [0, 0, 1, 1], [], []>} : vector<2x257xf32>, vector<257x1280xf32>, vector<2x1280xf32> -> vector<2x1280xf32>
    %3 = vector.extract_strided_slice %2 {offsets = [0, 0], sizes = [2, 640], strides = [1, 1]} : vector<2x1280xf32> to vector<2x640xf32>
    %4 = vector.extract_strided_slice %2 {offsets = [0, 640], sizes = [2, 640], strides = [1, 1]} : vector<2x1280xf32> to vector<2x640xf32>
    %5 = arith.mulf %3, %3 : vector<2x640xf32>
    %6 = arith.mulf %4, %4 : vector<2x640xf32>
    %7 = arith.addf %5, %6 : vector<2x640xf32>
    %c0_3 = arith.constant 0 : index
    %c0_4 = arith.constant 0 : index
    %8 = vector.load %arg2[%c0_3, %c0_4] : memref<640x384xf32, #tpu.memory_space<vmem>>, vector<640x384xf32>
    %cst_5 = arith.constant dense<0.000000e+00> : vector<2x384xf32>
    %9 = tpu.matmul %7, %8, %cst_5 {dimension_numbers = #tpu.dot_dimension_numbers<[1], [0], [0], [1], [0, 0, 1, 1], [], []>} : vector<2x640xf32>, vector<640x384xf32>, vector<2x384xf32> -> vector<2x384xf32>
    %cst_6 = arith.constant 9.99999974E-6 : f32
    %10 = vector.broadcast %cst_6 : f32 to vector<2x384xf32>
    %11 = arith.addf %9, %10 : vector<2x384xf32>
    %12 = math.log %11 : vector<2x384xf32>
    %cst_7 = arith.constant 4.500000e+00 : f32
    %13 = vector.broadcast %cst_7 : f32 to vector<2x384xf32>
    %14 = arith.addf %12, %13 : vector<2x384xf32>
    %cst_8 = arith.constant 5.000000e+00 : f32
    %15 = vector.broadcast %cst_8 : f32 to vector<2x384xf32>
    %16 = arith.divf %14, %15 : vector<2x384xf32>
    %c0_9 = arith.constant 0 : index
    %c0_10 = arith.constant 0 : index
    %17 = vector.load %arg3[%c0_9, %c0_10] : memref<384x8xf32, #tpu.memory_space<vmem>>, vector<384x8xf32>
    %cst_11 = arith.constant dense<0.000000e+00> : vector<2x8xf32>
    %18 = tpu.matmul %16, %17, %cst_11 {dimension_numbers = #tpu.dot_dimension_numbers<[1], [0], [0], [1], [0, 0, 1, 1], [], []>} : vector<2x384xf32>, vector<384x8xf32>, vector<2x8xf32> -> vector<2x8xf32>
    %c0_12 = arith.constant 0 : index
    %c0_13 = arith.constant 0 : index
    %19 = vector.load %arg4[%c0_12, %c0_13] : memref<1x8xf32, #tpu.memory_space<vmem>>, vector<1x8xf32>
    %20 = vector.broadcast %19 : vector<1x8xf32> to vector<2x8xf32>
    %21 = arith.addf %18, %20 : vector<2x8xf32>
    %c0_14 = arith.constant 0 : index
    %c0_15 = arith.constant 0 : index
    %22 = vector.load %arg5[%c0_14, %c0_15] : memref<2x8xf32, #tpu.memory_space<vmem>>, vector<2x8xf32>
    tpu.vector_store %arg5[%c0_14, %c0_15], %21 {strides = array<i32>} : memref<2x8xf32, #tpu.memory_space<vmem>>, vector<2x8xf32>,
    return
  }
}

</mosaic_0001>

<llo_original>
// kernel: passt_forward.1
$region0: #{passt_forward.1}
  #allocation0 [shape = 'u32[]', space=smem, size = 0x4, offset = 0x4, fixed_abs, tag = 'smem constant byte address 0x4 - core index']
  #allocation1 [shape = 'u32[144,128]{1,0:T(1,128)}', space=vmem, size = 0x12000, scoped, tag = 'internal scratch']
  %s0 = inlined_call_operand.vmem [shape: f32[2,257], index: 0, kind: input, shape index: {}]
  %s1 = inlined_call_operand.hbm [shape: f32[257,1280], index: 1, kind: input, shape index: {}]
  %s2 = inlined_call_operand.hbm [shape: f32[640,384], index: 2, kind: input, shape index: {}]
  %s3 = inlined_call_operand.vmem [shape: f32[384,8], index: 3, kind: input, shape index: {}]
  %s4 = inlined_call_operand.hbm [shape: f32[1,8], index: 4, kind: input, shape index: {}]
  %s5 = inlined_call_operand.hbm [shape: f32[2,8], index: 5, kind: output, shape index: {}]
  %s6 = sld [smem:[#allocation0]]
  $region42: #{passt_forward.1} parent=0
    _
  %s8 = ssub.s32 1, %s6
  %s9 = scalar_select 0, %s8, %s6
  $region1: #{passt_forward.1} parent=0
    #allocation2 [shape = 'u8[1351680]{0}', space=vmem, size = 0x14a000, scoped, tag = 'input window, operand 1, single buffered']
    #allocation3 [shape = 's32[1]{0}', space=sflag, size = 0x4, scoped, tag = 'scoped memory for passt_forward.1']
    #allocation4 [shape = 's32[1]{0}', space=sflag, size = 0x4, scoped, tag = 'scoped memory for passt_forward.1']
    #allocation5 [shape = 'u8[983040]{0}', space=vmem, size = 0xf0000, scoped, tag = 'input window, operand 2, single buffered']
    #allocation6 [shape = 's32[1]{0}', space=sflag, size = 0x4, scoped, tag = 'scoped memory for passt_forward.1']
    #allocation7 [shape = 'u8[512]{0}', space=vmem, size = 0x400, scoped, tag = 'input window, operand 4, single buffered']
    #allocation8 [shape = 'u8[1024]{0}', space=vmem, size = 0x400, scoped, tag = 'output window, operand 0, single buffered']
    %10 = vsyncpa [#allocation3], 0
    %11 = vsyncpa [#allocation6], 0
    %12 = vsyncpa [#allocation4], 0
    // Predicated region
    $region2: #{passt_forward.1} parent=1 // pred_check
      _
    $region3: #{passt_forward.1} parent=1 // pred_check_branch
      %14 = sbr.rel (0) target = $region5
    $region4: #{passt_forward.1} parent=1 // pred_region
      _
    $region5: #{passt_forward.1} parent=1 // pred_fallthru
      _
    // Predicated region
    $region6: #{passt_forward.1} parent=1 // pred_check
      _
    $region7: #{passt_forward.1} parent=1 // pred_check_branch
      %16 = sbr.rel (0) target = $region9
    $region8: #{passt_forward.1} parent=1 // pred_region
      %s18 = ssub.s32 42240, 42240
      %19 = vsyncadd [#allocation3], %s18
      %s20 = sshll.u32 [#allocation2], 4
      %s21 = int_to_ptr.vmem [resolvable:$true] %s20
      %26 = dma.hbm_to_vmem [thread:$0]  %s1, 42240, %s21, [#allocation3], 1280, 1280, 80
    $region9: #{passt_forward.1} parent=1 // pred_fallthru
      _
    // Predicated region
    $region10: #{passt_forward.1} parent=1 // pred_check
      _
    $region11: #{passt_forward.1} parent=1 // pred_check_branch
      %28 = sbr.rel (0) target = $region13
    $region12: #{passt_forward.1} parent=1 // pred_region
      %s30 = ssub.s32 30720, 30720
      %31 = vsyncadd [#allocation6], %s30
      %s32 = sshll.u32 [#allocation5], 4
      %s33 = int_to_ptr.vmem [resolvable:$true] %s32
      %38 = dma.hbm_to_vmem [thread:$0]  %s2, 30720, %s33, [#allocation6], 384, 384, 24
    $region13: #{passt_forward.1} parent=1 // pred_fallthru
      _
    // Predicated region
    $region14: #{passt_forward.1} parent=1 // pred_check
      _
    $region15: #{passt_forward.1} parent=1 // pred_check_branch
      %40 = sbr.rel (0) target = $region17
    $region16: #{passt_forward.1} parent=1 // pred_region
      _
    $region17: #{passt_forward.1} parent=1 // pred_fallthru
      _
    // Predicated region
    $region18: #{passt_forward.1} parent=1 // pred_check
      _
    $region19: #{passt_forward.1} parent=1 // pred_check_branch
      %42 = sbr.rel (0) target = $region21
    $region20: #{passt_forward.1} parent=1 // pred_region
      %s44 = ssub.s32 16, 16
      %45 = vsyncadd [#allocation6], %s44
      %s47 = sshll.u32 [#allocation7], 4
      %s48 = int_to_ptr.vmem [resolvable:$true] %s47
      %50 = dma.hbm_to_vmem [thread:$0]  %s4, 16, %s48, [#allocation6]
    $region21: #{passt_forward.1} parent=1 // pred_fallthru
      _
    // Predicated region
    $region22: #{passt_forward.1} parent=1 // pred_check
      _
    $region23: #{passt_forward.1} parent=1 // pred_check_branch
      %52 = sbr.rel (0) target = $region25
    $region24: #{passt_forward.1} parent=1 // pred_region
      %53 = dma.done [#allocation3], 42240
    $region25: #{passt_forward.1} parent=1 // pred_fallthru
      _
    // Predicated region
    $region26: #{passt_forward.1} parent=1 // pred_check
      _
    $region27: #{passt_forward.1} parent=1 // pred_check_branch
      %55 = sbr.rel (0) target = $region29
    $region28: #{passt_forward.1} parent=1 // pred_region
      %56 = dma.done [#allocation6], 30720
    $region29: #{passt_forward.1} parent=1 // pred_fallthru
      _
    // Predicated region
    $region30: #{passt_forward.1} parent=1 // pred_check
      _
    $region31: #{passt_forward.1} parent=1 // pred_check_branch
      %58 = sbr.rel (0) target = $region33
    $region32: #{passt_forward.1} parent=1 // pred_region
      %59 = dma.done [#allocation6], 16
    $region33: #{passt_forward.1} parent=1 // pred_fallthru
      _
    %v60 = vld [vmem:[%s0] sm:$0x3f]
    %v61 = vld [vmem:[#allocation2] sm:$0xff]
    %v62 = vld [vmem:[#allocation2 + $0x8] sm:$0xff]
    %v63 = vld [vmem:[#allocation2 + $0x10] sm:$0xff]
    %v64 = vld [vmem:[#allocation2 + $0x18] sm:$0xff]
    %v65 = vld [vmem:[#allocation2 + $0x20] sm:$0xff]
    %v66 = vld [vmem:[#allocation2 + $0x28] sm:$0xff]
    %v67 = vld [vmem:[#allocation2 + $0x30] sm:$0xff]
    %v68 = vld [vmem:[#allocation2 + $0x38] sm:$0xff]
    %v69 = vld [vmem:[#allocation2 + $0x40] sm:$0xff]
    %v70 = vld [vmem:[#allocation2 + $0x48] sm:$0xff]
    %v71 = vld [vmem:[#allocation2 + $0x50] sm:$0xff]
    %v72 = vld [vmem:[#allocation2 + $0x58] sm:$0xff]
    %v73 = vld [vmem:[#allocation2 + $0x60] sm:$0xff]
    %v74 = vld [vmem:[#allocation2 + $0x68] sm:$0xff]
    %v75 = vld [vmem:[#allocation2 + $0x70] sm:$0xff]
    %v76 = vld [vmem:[#allocation2 + $0x78] sm:$0xff]
    %v77 = vld [vmem:[#allocation2 + $0x80] sm:$0xff]
    %v78 = vld [vmem:[#allocation2 + $0x88] sm:$0xff]
    %v79 = vld [vmem:[#allocation2 + $0x90] sm:$0xff]
    %v80 = vld [vmem:[#allocation2 + $0x98] sm:$0xff]
    %v81 = vld [vmem:[#allocation2 + $0xa0] sm:$0xff]
    %v82 = vld [vmem:[#allocation2 + $0xa8] sm:$0xff]
    %v83 = vld [vmem:[#allocation2 + $0xb0] sm:$0xff]
    %v84 = vld [vmem:[#allocation2 + $0xb8] sm:$0xff]
    %v85 = vld [vmem:[#allocation2 + $0xc0] sm:$0xff]
    %v86 = vld [vmem:[#allocation2 + $0xc8] sm:$0xff]
    %v87 = vld [vmem:[#allocation2 + $0xd0] sm:$0xff]
    %v88 = vld [vmem:[#allocation2 + $0xd8] sm:$0xff]
    %v89 = vld [vmem:[#allocation2 + $0xe0] sm:$0xff]
    %v90 = vld [vmem:[#allocation2 + $0xe8] sm:$0xff]
    %v91 = vld [vmem:[#allocation2 + $0xf0] sm:$0xff]
    %v92 = vld [vmem:[#allocation2 + $0xf8] sm:$0xff]
    %v93 = vld [vmem:[#allocation2 + $0x100] sm:$0xff]
    %v94 = vld [vmem:[#allocation2 + $0x108] sm:$0xff]
    %v95 = vld [vmem:[#allocation2 + $0x110] sm:$0xff]
    %v96 = vld [vmem:[#allocation2 + $0x118] sm:$0xff]
    %v97 = vld [vmem:[#allocation2 + $0x120] sm:$0xff]
    %v98 = vld [vmem:[#allocation2 + $0x128] sm:$0xff]
    %v99 = vld [vmem:[#allocation2 + $0x130] sm:$0xff]
    %v100 = vld [vmem:[#allocation2 + $0x138] sm:$0xff]
    %v101 = vld [vmem:[#allocation2 + $0x140] sm:$0xff]
    %v102 = vld [vmem:[#allocation2 + $0x148] sm:$0xff]
    %v103 = vld [vmem:[#allocation2 + $0x150] sm:$0xff]
    %v104 = vld [vmem:[#allocation2 + $0x158] sm:$0xff]
    %v105 = vld [vmem:[#allocation2 + $0x160] sm:$0xff]
    %v106 = vld [vmem:[#allocation2 + $0x168] sm:$0xff]
    %v107 = vld [vmem:[#allocation2 + $0x170] sm:$0xff]
    %v108 = vld [vmem:[#allocation2 + $0x178] sm:$0xff]
    %v109 = vld [vmem:[#allocation2 + $0x180] sm:$0xff]
    %v110 = vld [vmem:[#allocation2 + $0x188] sm:$0xff]
    %v111 = vld [vmem:[#allocation2 + $0x190] sm:$0xff]
    %v112 = vld [vmem:[#allocation2 + $0x198] sm:$0xff]
    %v113 = vld [vmem:[#allocation2 + $0x1a0] sm:$0xff]
    %v114 = vld [vmem:[#allocation2 + $0x1a8] sm:$0xff]
    %v115 = vld [vmem:[#allocation2 + $0x1b0] sm:$0xff]
    %v116 = vld [vmem:[#allocation2 + $0x1b8] sm:$0xff]
    %v117 = vld [vmem:[#allocation2 + $0x1c0] sm:$0xff]
    %v118 = vld [vmem:[#allocation2 + $0x1c8] sm:$0xff]
    %v119 = vld [vmem:[#allocation2 + $0x1d0] sm:$0xff]
    %v120 = vld [vmem:[#allocation2 + $0x1d8] sm:$0xff]
    %v121 = vld [vmem:[#allocation2 + $0x1e0] sm:$0xff]
    %v122 = vld [vmem:[#allocation2 + $0x1e8] sm:$0xff]
    %v123 = vld [vmem:[#allocation2 + $0x1f0] sm:$0xff]
    %v124 = vld [vmem:[#allocation2 + $0x1f8] sm:$0xff]
    %v125 = vld [vmem:[#allocation2 + $0x200] sm:$0xff]
    %v126 = vld [vmem:[#allocation2 + $0x208] sm:$0xff]
    %v127 = vld [vmem:[#allocation2 + $0x210] sm:$0xff]
    %v128 = vld [vmem:[#allocation2 + $0x218] sm:$0xff]
    %v129 = vld [vmem:[#allocation2 + $0x220] sm:$0xff]
    %v130 = vld [vmem:[#allocation2 + $0x228] sm:$0xff]
    %v131 = vld [vmem:[#allocation2 + $0x230] sm:$0xff]
    %v132 = vld [vmem:[#allocation2 + $0x238] sm:$0xff]
    %v133 = vld [vmem:[#allocation2 + $0x240] sm:$0xff]
    %v134 = vld [vmem:[#allocation2 + $0x248] sm:$0xff]
    %v135 = vld [vmem:[#allocation2 + $0x250] sm:$0xff]
    %v136 = vld [vmem:[#allocation2 + $0x258] sm:$0xff]
    %v137 = vld [vmem:[#allocation2 + $0x260] sm:$0xff]
    %v138 = vld [vmem:[#allocation2 + $0x268] sm:$0xff]
    %v139 = vld [vmem:[#allocation2 + $0x270] sm:$0xff]
    %v140 = vld [vmem:[#allocation2 + $0x278] sm:$0xff]
    %v141 = vld [vmem:[#allocation2 + $0x280] sm:$0xff]
    %v142 = vld [vmem:[#allocation2 + $0x288] sm:$0xff]
    %v143 = vld [vmem:[#allocation2 + $0x290] sm:$0xff]
    %v144 = vld [vmem:[#allocation2 + $0x298] sm:$0xff]
    %v145 = vld [vmem:[#allocation2 + $0x2a0] sm:$0xff]
    %v146 = vld [vmem:[#allocation2 + $0x2a8] sm:$0xff]
    %v147 = vld [vmem:[#allocation2 + $0x2b0] sm:$0xff]
    %v148 = vld [vmem:[#allocation2 + $0x2b8] sm:$0xff]
    %v149 = vld [vmem:[#allocation2 + $0x2c0] sm:$0xff]
    %v150 = vld [vmem:[#allocation2 + $0x2c8] sm:$0xff]
    %v151 = vld [vmem:[#allocation2 + $0x2d0] sm:$0xff]
    %v152 = vld [vmem:[#allocation2 + $0x2d8] sm:$0xff]
    %v153 = vld [vmem:[#allocation2 + $0x2e0] sm:$0xff]
    %v154 = vld [vmem:[#allocation2 + $0x2e8] sm:$0xff]
    %v155 = vld [vmem:[#allocation2 + $0x2f0] sm:$0xff]
    %v156 = vld [vmem:[#allocation2 + $0x2f8] sm:$0xff]
    %v157 = vld [vmem:[#allocation2 + $0x300] sm:$0xff]
    %v158 = vld [vmem:[#allocation2 + $0x308] sm:$0xff]
    %v159 = vld [vmem:[#allocation2 + $0x310] sm:$0xff]
    %v160 = vld [vmem:[#allocation2 + $0x318] sm:$0xff]
    %v161 = vld [vmem:[#allocation2 + $0x320] sm:$0xff]
    %v162 = vld [vmem:[#allocation2 + $0x328] sm:$0xff]
    %v163 = vld [vmem:[#allocation2 + $0x330] sm:$0xff]
    %v164 = vld [vmem:[#allocation2 + $0x338] sm:$0xff]
    %v165 = vld [vmem:[#allocation2 + $0x340] sm:$0xff]
    %v166 = vld [vmem:[#allocation2 + $0x348] sm:$0xff]
    %v167 = vld [vmem:[#allocation2 + $0x350] sm:$0xff]
    %v168 = vld [vmem:[#allocation2 + $0x358] sm:$0xff]
    %v169 = vld [vmem:[#allocation2 + $0x360] sm:$0xff]
    %v170 = vld [vmem:[#allocation2 + $0x368] sm:$0xff]
    %v171 = vld [vmem:[#allocation2 + $0x370] sm:$0xff]
    %v172 = vld [vmem:[#allocation2 + $0x378] sm:$0xff]
    %v173 = vld [vmem:[#allocation2 + $0x380] sm:$0xff]
    %v174 = vld [vmem:[#allocation2 + $0x388] sm:$0xff]
    %v175 = vld [vmem:[#allocation2 + $0x390] sm:$0xff]
    %v176 = vld [vmem:[#allocation2 + $0x398] sm:$0xff]
    %v177 = vld [vmem:[#allocation2 + $0x3a0] sm:$0xff]
    %v178 = vld [vmem:[#allocation2 + $0x3a8] sm:$0xff]
    %v179 = vld [vmem:[#allocation2 + $0x3b0] sm:$0xff]
    %v180 = vld [vmem:[#allocation2 + $0x3b8] sm:$0xff]
    %v181 = vld [vmem:[#allocation2 + $0x3c0] sm:$0xff]
    %v182 = vld [vmem:[#allocation2 + $0x3c8] sm:$0xff]
    %v183 = vld [vmem:[#allocation2 + $0x3d0] sm:$0xff]
    %v184 = vld [vmem:[#allocation2 + $0x3d8] sm:$0xff]
    %v185 = vld [vmem:[#allocation2 + $0x3e0] sm:$0xff]
    %v186 = vld [vmem:[#allocation2 + $0x3e8] sm:$0xff]
    %v187 = vld [vmem:[#allocation2 + $0x3f0] sm:$0xff]
    %v188 = vld [vmem:[#allocation2 + $0x3f8] sm:$0xff]
    %v189 = vld [vmem:[#allocation2 + $0x400] sm:$0xff]
    %v190 = vld [vmem:[#allocation2 + $0x408] sm:$0xff]
    %v191 = vld [vmem:[#allocation2 + $0x410] sm:$0xff]
    %v192 = vld [vmem:[#allocation2 + $0x418] sm:$0xff]
    %v193 = vld [vmem:[#allocation2 + $0x420] sm:$0xff]
    %v194 = vld [vmem:[#allocation2 + $0x428] sm:$0xff]
    %v195 = vld [vmem:[#allocation2 + $0x430] sm:$0xff]
    %v196 = vld [vmem:[#allocation2 + $0x438] sm:$0xff]
    %v197 = vld [vmem:[#allocation2 + $0x440] sm:$0xff]
    %v198 = vld [vmem:[#allocation2 + $0x448] sm:$0xff]
    %v199 = vld [vmem:[#allocation2 + $0x450] sm:$0xff]
    %v200 = vld [vmem:[#allocation2 + $0x458] sm:$0xff]
    %v201 = vld [vmem:[#allocation2 + $0x460] sm:$0xff]
    %v202 = vld [vmem:[#allocation2 + $0x468] sm:$0xff]
    %v203 = vld [vmem:[#allocation2 + $0x470] sm:$0xff]
    %v204 = vld [vmem:[#allocation2 + $0x478] sm:$0xff]
    %v205 = vld [vmem:[#allocation2 + $0x480] sm:$0xff]
    %v206 = vld [vmem:[#allocation2 + $0x488] sm:$0xff]
    %v207 = vld [vmem:[#allocation2 + $0x490] sm:$0xff]
    %v208 = vld [vmem:[#allocation2 + $0x498] sm:$0xff]
    %v209 = vld [vmem:[#allocation2 + $0x4a0] sm:$0xff]
    %v210 = vld [vmem:[#allocation2 + $0x4a8] sm:$0xff]
    %v211 = vld [vmem:[#allocation2 + $0x4b0] sm:$0xff]
    %v212 = vld [vmem:[#allocation2 + $0x4b8] sm:$0xff]
    %v213 = vld [vmem:[#allocation2 + $0x4c0] sm:$0xff]
    %v214 = vld [vmem:[#allocation2 + $0x4c8] sm:$0xff]
    %v215 = vld [vmem:[#allocation2 + $0x4d0] sm:$0xff]
    %v216 = vld [vmem:[#allocation2 + $0x4d8] sm:$0xff]
    %v217 = vld [vmem:[#allocation2 + $0x4e0] sm:$0xff]
    %v218 = vld [vmem:[#allocation2 + $0x4e8] sm:$0xff]
    %v219 = vld [vmem:[#allocation2 + $0x4f0] sm:$0xff]
    %v220 = vld [vmem:[#allocation2 + $0x4f8] sm:$0xff]
    %v221 = vld [vmem:[#allocation2 + $0x500] sm:$0xff]
    %v222 = vld [vmem:[#allocation2 + $0x508] sm:$0xff]
    %v223 = vld [vmem:[#allocation2 + $0x510] sm:$0xff]
    %v224 = vld [vmem:[#allocation2 + $0x518] sm:$0xff]
    %v225 = vld [vmem:[#allocation2 + $0x520] sm:$0xff]
    %v226 = vld [vmem:[#allocation2 + $0x528] sm:$0xff]
    %v227 = vld [vmem:[#allocation2 + $0x530] sm:$0xff]
    %v228 = vld [vmem:[#allocation2 + $0x538] sm:$0xff]
    %v229 = vld [vmem:[#allocation2 + $0x540] sm:$0xff]
    %v230 = vld [vmem:[#allocation2 + $0x548] sm:$0xff]
    %v231 = vld [vmem:[#allocation2 + $0x550] sm:$0xff]
    %v232 = vld [vmem:[#allocation2 + $0x558] sm:$0xff]
    %v233 = vld [vmem:[#allocation2 + $0x560] sm:$0xff]
    %v234 = vld [vmem:[#allocation2 + $0x568] sm:$0xff]
    %v235 = vld [vmem:[#allocation2 + $0x570] sm:$0xff]
    %v236 = vld [vmem:[#allocation2 + $0x578] sm:$0xff]
    %v237 = vld [vmem:[#allocation2 + $0x580] sm:$0xff]
    %v238 = vld [vmem:[#allocation2 + $0x588] sm:$0xff]
    %v239 = vld [vmem:[#allocation2 + $0x590] sm:$0xff]
    %v240 = vld [vmem:[#allocation2 + $0x598] sm:$0xff]
    %v241 = vld [vmem:[#allocation2 + $0x5a0] sm:$0xff]
    %v242 = vld [vmem:[#allocation2 + $0x5a8] sm:$0xff]
    %v243 = vld [vmem:[#allocation2 + $0x5b0] sm:$0xff]
    %v244 = vld [vmem:[#allocation2 + $0x5b8] sm:$0xff]
    %v245 = vld [vmem:[#allocation2 + $0x5c0] sm:$0xff]
    %v246 = vld [vmem:[#allocation2 + $0x5c8] sm:$0xff]
    %v247 = vld [vmem:[#allocation2 + $0x5d0] sm:$0xff]
    %v248 = vld [vmem:[#allocation2 + $0x5d8] sm:$0xff]
    %v249 = vld [vmem:[#allocation2 + $0x5e0] sm:$0xff]
    %v250 = vld [vmem:[#allocation2 + $0x5e8] sm:$0xff]
    %v251 = vld [vmem:[#allocation2 + $0x5f0] sm:$0xff]
    %v252 = vld [vmem:[#allocation2 + $0x5f8] sm:$0xff]
    %v253 = vld [vmem:[#allocation2 + $0x600] sm:$0xff]
    %v254 = vld [vmem:[#allocation2 + $0x608] sm:$0xff]
    %v255 = vld [vmem:[#allocation2 + $0x610] sm:$0xff]
    %v256 = vld [vmem:[#allocation2 + $0x618] sm:$0xff]
    %v257 = vld [vmem:[#allocation2 + $0x620] sm:$0xff]
    %v258 = vld [vmem:[#allocation2 + $0x628] sm:$0xff]
    %v259 = vld [vmem:[#allocation2 + $0x630] sm:$0xff]
    %v260 = vld [vmem:[#allocation2 + $0x638] sm:$0xff]
    %v261 = vld [vmem:[#allocation2 + $0x640] sm:$0xff]
    %v262 = vld [vmem:[#allocation2 + $0x648] sm:$0xff]
    %v263 = vld [vmem:[#allocation2 + $0x650] sm:$0xff]
    %v264 = vld [vmem:[#allocation2 + $0x658] sm:$0xff]
    %v265 = vld [vmem:[#allocation2 + $0x660] sm:$0xff]
    %v266 = vld [vmem:[#allocation2 + $0x668] sm:$0xff]
    %v267 = vld [vmem:[#allocation2 + $0x670] sm:$0xff]
    %v268 = vld [vmem:[#allocation2 + $0x678] sm:$0xff]
    %v269 = vld [vmem:[#allocation2 + $0x680] sm:$0xff]
    %v270 = vld [vmem:[#allocation2 + $0x688] sm:$0xff]
    %v271 = vld [vmem:[#allocation2 + $0x690] sm:$0xff]
    %v272 = vld [vmem:[#allocation2 + $0x698] sm:$0xff]
    %v273 = vld [vmem:[#allocation2 + $0x6a0] sm:$0xff]
    %v274 = vld [vmem:[#allocation2 + $0x6a8] sm:$0xff]
    %v275 = vld [vmem:[#allocation2 + $0x6b0] sm:$0xff]
    %v276 = vld [vmem:[#allocation2 + $0x6b8] sm:$0xff]
    %v277 = vld [vmem:[#allocation2 + $0x6c0] sm:$0xff]
    %v278 = vld [vmem:[#allocation2 + $0x6c8] sm:$0xff]
    %v279 = vld [vmem:[#allocation2 + $0x6d0] sm:$0xff]
    %v280 = vld [vmem:[#allocation2 + $0x6d8] sm:$0xff]
    %v281 = vld [vmem:[#allocation2 + $0x6e0] sm:$0xff]
    %v282 = vld [vmem:[#allocation2 + $0x6e8] sm:$0xff]
    %v283 = vld [vmem:[#allocation2 + $0x6f0] sm:$0xff]
    %v284 = vld [vmem:[#allocation2 + $0x6f8] sm:$0xff]
    %v285 = vld [vmem:[#allocation2 + $0x700] sm:$0xff]
    %v286 = vld [vmem:[#allocation2 + $0x708] sm:$0xff]
    %v287 = vld [vmem:[#allocation2 + $0x710] sm:$0xff]
    %v288 = vld [vmem:[#allocation2 + $0x718] sm:$0xff]
    %v289 = vld [vmem:[#allocation2 + $0x720] sm:$0xff]
    %v290 = vld [vmem:[#allocation2 + $0x728] sm:$0xff]
    %v291 = vld [vmem:[#allocation2 + $0x730] sm:$0xff]
    %v292 = vld [vmem:[#allocation2 + $0x738] sm:$0xff]
    %v293 = vld [vmem:[#allocation2 + $0x740] sm:$0xff]
    %v294 = vld [vmem:[#allocation2 + $0x748] sm:$0xff]
    %v295 = vld [vmem:[#allocation2 + $0x750] sm:$0xff]
    %v296 = vld [vmem:[#allocation2 + $0x758] sm:$0xff]
    %v297 = vld [vmem:[#allocation2 + $0x760] sm:$0xff]
    %v298 = vld [vmem:[#allocation2 + $0x768] sm:$0xff]
    %v299 = vld [vmem:[#allocation2 + $0x770] sm:$0xff]
    %v300 = vld [vmem:[#allocation2 + $0x778] sm:$0xff]
    %v301 = vld [vmem:[#allocation2 + $0x780] sm:$0xff]
    %v302 = vld [vmem:[#allocation2 + $0x788] sm:$0xff]
    %v303 = vld [vmem:[#allocation2 + $0x790] sm:$0xff]
    %v304 = vld [vmem:[#allocation2 + $0x798] sm:$0xff]
    %v305 = vld [vmem:[#allocation2 + $0x7a0] sm:$0xff]
    %v306 = vld [vmem:[#allocation2 + $0x7a8] sm:$0xff]
    %v307 = vld [vmem:[#allocation2 + $0x7b0] sm:$0xff]
    %v308 = vld [vmem:[#allocation2 + $0x7b8] sm:$0xff]
    %v309 = vld [vmem:[#allocation2 + $0x7c0] sm:$0xff]
    %v310 = vld [vmem:[#allocation2 + $0x7c8] sm:$0xff]
    %v311 = vld [vmem:[#allocation2 + $0x7d0] sm:$0xff]
    %v312 = vld [vmem:[#allocation2 + $0x7d8] sm:$0xff]
    %v313 = vld [vmem:[#allocation2 + $0x7e0] sm:$0xff]
    %v314 = vld [vmem:[#allocation2 + $0x7e8] sm:$0xff]
    %v315 = vld [vmem:[#allocation2 + $0x7f0] sm:$0xff]
    %v316 = vld [vmem:[#allocation2 + $0x7f8] sm:$0xff]
    %v317 = vld [vmem:[#allocation2 + $0x800] sm:$0xff]
    %v318 = vld [vmem:[#allocation2 + $0x808] sm:$0xff]
    %v319 = vld [vmem:[#allocation2 + $0x810] sm:$0xff]
    %v320 = vld [vmem:[#allocation2 + $0x818] sm:$0xff]
    %v321 = vld [vmem:[#allocation2 + $0x820] sm:$0xff]
    %v322 = vld [vmem:[#allocation2 + $0x828] sm:$0xff]
    %v323 = vld [vmem:[#allocation2 + $0x830] sm:$0xff]
    %v324 = vld [vmem:[#allocation2 + $0x838] sm:$0xff]
    %v325 = vld [vmem:[#allocation2 + $0x840] sm:$0xff]
    %v326 = vld [vmem:[#allocation2 + $0x848] sm:$0xff]
    %v327 = vld [vmem:[#allocation2 + $0x850] sm:$0xff]
    %v328 = vld [vmem:[#allocation2 + $0x858] sm:$0xff]
    %v329 = vld [vmem:[#allocation2 + $0x860] sm:$0xff]
    %v330 = vld [vmem:[#allocation2 + $0x868] sm:$0xff]
    %v331 = vld [vmem:[#allocation2 + $0x870] sm:$0xff]
    %v332 = vld [vmem:[#allocation2 + $0x878] sm:$0xff]
    %v333 = vld [vmem:[#allocation2 + $0x880] sm:$0xff]
    %v334 = vld [vmem:[#allocation2 + $0x888] sm:$0xff]
    %v335 = vld [vmem:[#allocation2 + $0x890] sm:$0xff]
    %v336 = vld [vmem:[#allocation2 + $0x898] sm:$0xff]
    %v337 = vld [vmem:[#allocation2 + $0x8a0] sm:$0xff]
    %v338 = vld [vmem:[#allocation2 + $0x8a8] sm:$0xff]
    %v339 = vld [vmem:[#allocation2 + $0x8b0] sm:$0xff]
    %v340 = vld [vmem:[#allocation2 + $0x8b8] sm:$0xff]
    %v341 = vld [vmem:[#allocation2 + $0x8c0] sm:$0xff]
    %v342 = vld [vmem:[#allocation2 + $0x8c8] sm:$0xff]
    %v343 = vld [vmem:[#allocation2 + $0x8d0] sm:$0xff]
    %v344 = vld [vmem:[#allocation2 + $0x8d8] sm:$0xff]
    %v345 = vld [vmem:[#allocation2 + $0x8e0] sm:$0xff]
    %v346 = vld [vmem:[#allocation2 + $0x8e8] sm:$0xff]
    %v347 = vld [vmem:[#allocation2 + $0x8f0] sm:$0xff]
    %v348 = vld [vmem:[#allocation2 + $0x8f8] sm:$0xff]
    %v349 = vld [vmem:[#allocation2 + $0x900] sm:$0xff]
    %v350 = vld [vmem:[#allocation2 + $0x908] sm:$0xff]
    %v351 = vld [vmem:[#allocation2 + $0x910] sm:$0xff]
    %v352 = vld [vmem:[#allocation2 + $0x918] sm:$0xff]
    %v353 = vld [vmem:[#allocation2 + $0x920] sm:$0xff]
    %v354 = vld [vmem:[#allocation2 + $0x928] sm:$0xff]
    %v355 = vld [vmem:[#allocation2 + $0x930] sm:$0xff]
    %v356 = vld [vmem:[#allocation2 + $0x938] sm:$0xff]
    %v357 = vld [vmem:[#allocation2 + $0x940] sm:$0xff]
    %v358 = vld [vmem:[#allocation2 + $0x948] sm:$0xff]
    %v359 = vld [vmem:[#allocation2 + $0x950] sm:$0xff]
    %v360 = vld [vmem:[#allocation2 + $0x958] sm:$0xff]
    %v361 = vld [vmem:[#allocation2 + $0x960] sm:$0xff]
    %v362 = vld [vmem:[#allocation2 + $0x968] sm:$0xff]
    %v363 = vld [vmem:[#allocation2 + $0x970] sm:$0xff]
    %v364 = vld [vmem:[#allocation2 + $0x978] sm:$0xff]
    %v365 = vld [vmem:[#allocation2 + $0x980] sm:$0xff]
    %v366 = vld [vmem:[#allocation2 + $0x988] sm:$0xff]
    %v367 = vld [vmem:[#allocation2 + $0x990] sm:$0xff]
    %v368 = vld [vmem:[#allocation2 + $0x998] sm:$0xff]
    %v369 = vld [vmem:[#allocation2 + $0x9a0] sm:$0xff]
    %v370 = vld [vmem:[#allocation2 + $0x9a8] sm:$0xff]
    %v371 = vld [vmem:[#allocation2 + $0x9b0] sm:$0xff]
    %v372 = vld [vmem:[#allocation2 + $0x9b8] sm:$0xff]
    %v373 = vld [vmem:[#allocation2 + $0x9c0] sm:$0xff]
    %v374 = vld [vmem:[#allocation2 + $0x9c8] sm:$0xff]
    %v375 = vld [vmem:[#allocation2 + $0x9d0] sm:$0xff]
    %v376 = vld [vmem:[#allocation2 + $0x9d8] sm:$0xff]
    %v377 = vld [vmem:[#allocation2 + $0x9e0] sm:$0xff]
    %v378 = vld [vmem:[#allocation2 + $0x9e8] sm:$0xff]
    %v379 = vld [vmem:[#allocation2 + $0x9f0] sm:$0xff]
    %v380 = vld [vmem:[#allocation2 + $0x9f8] sm:$0xff]
    %v381 = vld [vmem:[#allocation2 + $0xa00] sm:$0x1]
    %v382 = vld [vmem:[#allocation2 + $0xa08] sm:$0x1]
    %v383 = vld [vmem:[#allocation2 + $0xa10] sm:$0x1]
    %v384 = vld [vmem:[#allocation2 + $0xa18] sm:$0x1]
    %v385 = vld [vmem:[#allocation2 + $0xa20] sm:$0x1]
    %v386 = vld [vmem:[#allocation2 + $0xa28] sm:$0x1]
    %v387 = vld [vmem:[#allocation2 + $0xa30] sm:$0x1]
    %v388 = vld [vmem:[#allocation2 + $0xa38] sm:$0x1]
    %v389 = vld [vmem:[#allocation2 + $0xa40] sm:$0x1]
    %v390 = vld [vmem:[#allocation2 + $0xa48] sm:$0x1]
    %v392 = vcombine.high %v60, %v60
    %v394 = vunpack.c.l.s4 1983009808
    %v395 = vunpack.c.0.s8 %v394
    %v396 = vlaneseq
    %v397 = vshrl.u32 %v396, 7
    %v398 = vsub.s32 %v395, %v397
    %v399 = vrot.slane %v60, %v398
    %v401 = vunpack.c.l.s4 1983009808
    %v402 = vunpack.c.0.s8 %v401
    %v403 = vlaneseq
    %v404 = vshrl.u32 %v403, 7
    %v405 = vsub.s32 %v402, %v404
    %v406 = vrot.slane %v392, %v405
    %v407 = vcombine.high %v399, %v399
    %vm410 = vcmask 7168
    %v411 = vsel %vm410, %v406, 0
    %vm413 = vcmask 1040384
    %v415 = vsel %vm413, %v381, 0
    %v418 = vsel %vm413, %v382, 0
    %v421 = vsel %vm413, %v383, 0
    %v424 = vsel %vm413, %v384, 0
    %v427 = vsel %vm413, %v385, 0
    %v430 = vsel %vm413, %v386, 0
    %v433 = vsel %vm413, %v387, 0
    %v436 = vsel %vm413, %v388, 0
    %v439 = vsel %vm413, %v389, 0
    %v442 = vsel %vm413, %v390, 0
    %444 = vmatprep.subr.mxu0 %v62
    %445 = vmatpush1.msra.mxu0 %v61
    %446 = vmatprep.subr.mxu0 %v72
    %447 = vmatpush1.msra.mxu0 %v71
    %448 = vmatprep.subr.mxu0 %v82
    %449 = vmatpush1.msra.mxu0 %v81
    %450 = vmatprep.subr.mxu0 %v92
    %451 = vmatpush1.msra.mxu0 %v91
    %452 = vmatprep.subr.mxu0 %v102
    %453 = vmatpush1.msra.mxu0 %v101
    %454 = vmatprep.subr.mxu0 %v112
    %455 = vmatpush1.msra.mxu0 %v111
    %456 = vmatprep.subr.mxu0 %v122
    %457 = vmatpush1.msra.mxu0 %v121
    %458 = vmatprep.subr.mxu0 %v132
    %459 = vmatpush1.msra.mxu0 %v131
    %460 = vmatprep.subr.mxu0 %v142
    %461 = vmatpush1.msra.mxu0 %v141
    %462 = vmatprep.subr.mxu0 %v152
    %463 = vmatpush1.msra.mxu0 %v151
    %464 = vmatprep.subr.mxu0 %v162
    %465 = vmatpush1.msra.mxu0 %v161
    %466 = vmatprep.subr.mxu0 %v172
    %467 = vmatpush1.msra.mxu0 %v171
    %468 = vmatprep.subr.mxu0 %v182
    %469 = vmatpush1.msra.mxu0 %v181
    %470 = vmatprep.subr.mxu0 %v192
    %471 = vmatpush1.msra.mxu0 %v191
    %472 = vmatprep.subr.mxu0 %v202
    %473 = vmatpush1.msra.mxu0 %v201
    %474 = vmatprep.subr.mxu0 %v212
    %475 = vmatpush1.msra.mxu0 %v211
    %476 = vmatprep.subr.mxu0 %v222
    %477 = vmatpush1.msra.mxu0 %v221
    %478 = vmatprep.subr.mxu0 %v232
    %479 = vmatpush1.msra.mxu0 %v231
    %480 = vmatprep.subr.mxu0 %v242
    %481 = vmatpush1.msra.mxu0 %v241
    %482 = vmatprep.subr.mxu0 %v252
    %483 = vmatpush1.msra.mxu0 %v251
    %484 = vmatprep.subr.mxu0 %v262
    %485 = vmatpush1.msra.mxu0 %v261
    %486 = vmatprep.subr.mxu0 %v272
    %487 = vmatpush1.msra.mxu0 %v271
    %488 = vmatprep.subr.mxu0 %v282
    %489 = vmatpush1.msra.mxu0 %v281
    %490 = vmatprep.subr.mxu0 %v292
    %491 = vmatpush1.msra.mxu0 %v291
    %492 = vmatprep.subr.mxu0 %v302
    %493 = vmatpush1.msra.mxu0 %v301
    %494 = vmatprep.subr.mxu0 %v312
    %495 = vmatpush1.msra.mxu0 %v311
    %496 = vmatprep.subr.mxu0 %v322
    %497 = vmatpush1.msra.mxu0 %v321
    %498 = vmatprep.subr.mxu0 %v332
    %499 = vmatpush1.msra.mxu0 %v331
    %500 = vmatprep.subr.mxu0 %v342
    %501 = vmatpush1.msra.mxu0 %v341
    %502 = vmatprep.subr.mxu0 %v352
    %503 = vmatpush1.msra.mxu0 %v351
    %504 = vmatprep.subr.mxu0 %v362
    %505 = vmatpush1.msra.mxu0 %v361
    %506 = vmatprep.subr.mxu0 %v372
    %507 = vmatpush1.msra.mxu0 %v371
    %508 = vmatprep.mubr.f32.mxu0 %v407
    %509 = vmatmul.mubr.f32.gmra.mrb[0].mxu0 %v399
    %v510 = vpop.f32.mrb[0].mxu0
    %v511 = vadd.f32 0.0, %v510
    %v512 = vpop.f32.mrb[0].mxu0
    %v513 = vadd.f32 0.0, %v512
    %514 = vdwg.mxu0
    %515 = vmatprep.subr.mxu0 %v418
    %516 = vmatpush1.msra.mxu0 %v415
    %517 = vmatprep.subr.mxu0 0.0
    %518 = vmatpush1.msra.mxu0 0.0
    %519 = vmatprep.subr.mxu0 0.0
    %520 = vmatpush1.msra.mxu0 0.0
    %521 = vmatprep.subr.mxu0 0.0
    %522 = vmatpush1.msra.mxu0 0.0
    %523 = vmatprep.subr.mxu0 0.0
    %524 = vmatpush1.msra.mxu0 0.0
    %525 = vmatprep.subr.mxu0 0.0
    %526 = vmatpush1.msra.mxu0 0.0
    %527 = vmatprep.subr.mxu0 0.0
    %528 = vmatpush1.msra.mxu0 0.0
    %529 = vmatprep.subr.mxu0 0.0
    %530 = vmatpush1.msra.mxu0 0.0
    %531 = vmatprep.subr.mxu0 0.0
    %532 = vmatpush1.msra.mxu0 0.0
    %533 = vmatprep.subr.mxu0 0.0
    %534 = vmatpush1.msra.mxu0 0.0
    %535 = vmatprep.subr.mxu0 0.0
    %536 = vmatpush1.msra.mxu0 0.0
    %537 = vmatprep.subr.mxu0 0.0
    %538 = vmatpush1.msra.mxu0 0.0
    %539 = vmatprep.subr.mxu0 0.0
    %540 = vmatpush1.msra.mxu0 0.0
    %541 = vmatprep.subr.mxu0 0.0
    %542 = vmatpush1.msra.mxu0 0.0
    %543 = vmatprep.subr.mxu0 0.0
    %544 = vmatpush1.msra.mxu0 0.0
    %545 = vmatprep.subr.mxu0 0.0
    %546 = vmatpush1.msra.mxu0 0.0
    %547 = vmatprep.subr.mxu0 0.0
    %548 = vmatpush1.msra.mxu0 0.0
    %549 = vmatprep.subr.mxu0 0.0
    %550 = vmatpush1.msra.mxu0 0.0
    %551 = vmatprep.subr.mxu0 0.0
    %552 = vmatpush1.msra.mxu0 0.0
    %553 = vmatprep.subr.mxu0 0.0
    %554 = vmatpush1.msra.mxu0 0.0
    %555 = vmatprep.subr.mxu0 0.0
    %556 = vmatpush1.msra.mxu0 0.0
    %557 = vmatprep.subr.mxu0 0.0
    %558 = vmatpush1.msra.mxu0 0.0
    %559 = vmatprep.subr.mxu0 0.0
    %560 = vmatpush1.msra.mxu0 0.0
    %561 = vmatprep.subr.mxu0 0.0
    %562 = vmatpush1.msra.mxu0 0.0
    %563 = vmatprep.subr.mxu0 0.0
    %564 = vmatpush1.msra.mxu0 0.0
    %565 = vmatprep.subr.mxu0 0.0
    %566 = vmatpush1.msra.mxu0 0.0
    %567 = vmatprep.subr.mxu0 0.0
    %568 = vmatpush1.msra.mxu0 0.0
    %569 = vmatprep.subr.mxu0 0.0
    %570 = vmatpush1.msra.mxu0 0.0
    %571 = vmatprep.subr.mxu0 0.0
    %572 = vmatpush1.msra.mxu0 0.0
    %573 = vmatprep.subr.mxu0 0.0
    %574 = vmatpush1.msra.mxu0 0.0
    %575 = vmatprep.subr.mxu0 0.0
    %576 = vmatpush1.msra.mxu0 0.0
    %577 = vmatprep.subr.mxu0 0.0
    %578 = vmatpush1.msra.mxu0 0.0
    %579 = vmatprep.mubr.f32.mxu0 0.0
    %580 = vmatmul.mubr.f32.gmra.mrb[0].mxu0 %v411
    %v581 = vpop.f32.mrb[0].mxu0
    %v582 = vadd.f32 %v511, %v581
    %v583 = vpop.f32.mrb[0].mxu0
    %v584 = vadd.f32 %v513, %v583
    %585 = vdwg.mxu0
    %586 = vmatprep.subr.mxu0 %v64
    %587 = vmatpush1.msra.mxu0 %v63
    %588 = vmatprep.subr.mxu0 %v74
    %589 = vmatpush1.msra.mxu0 %v73
    %590 = vmatprep.subr.mxu0 %v84
    %591 = vmatpush1.msra.mxu0 %v83
    %592 = vmatprep.subr.mxu0 %v94
    %593 = vmatpush1.msra.mxu0 %v93
    %594 = vmatprep.subr.mxu0 %v104
    %595 = vmatpush1.msra.mxu0 %v103
    %596 = vmatprep.subr.mxu0 %v114
    %597 = vmatpush1.msra.mxu0 %v113
    %598 = vmatprep.subr.mxu0 %v124
    %599 = vmatpush1.msra.mxu0 %v123
    %600 = vmatprep.subr.mxu0 %v134
    %601 = vmatpush1.msra.mxu0 %v133
    %602 = vmatprep.subr.mxu0 %v144
    %603 = vmatpush1.msra.mxu0 %v143
    %604 = vmatprep.subr.mxu0 %v154
    %605 = vmatpush1.msra.mxu0 %v153
    %606 = vmatprep.subr.mxu0 %v164
    %607 = vmatpush1.msra.mxu0 %v163
    %608 = vmatprep.subr.mxu0 %v174
    %609 = vmatpush1.msra.mxu0 %v173
    %610 = vmatprep.subr.mxu0 %v184
    %611 = vmatpush1.msra.mxu0 %v183
    %612 = vmatprep.subr.mxu0 %v194
    %613 = vmatpush1.msra.mxu0 %v193
    %614 = vmatprep.subr.mxu0 %v204
    %615 = vmatpush1.msra.mxu0 %v203
    %616 = vmatprep.subr.mxu0 %v214
    %617 = vmatpush1.msra.mxu0 %v213
    %618 = vmatprep.subr.mxu0 %v224
    %619 = vmatpush1.msra.mxu0 %v223
    %620 = vmatprep.subr.mxu0 %v234
    %621 = vmatpush1.msra.mxu0 %v233
    %622 = vmatprep.subr.mxu0 %v244
    %623 = vmatpush1.msra.mxu0 %v243
    %624 = vmatprep.subr.mxu0 %v254
    %625 = vmatpush1.msra.mxu0 %v253
    %626 = vmatprep.subr.mxu0 %v264
    %627 = vmatpush1.msra.mxu0 %v263
    %628 = vmatprep.subr.mxu0 %v274
    %629 = vmatpush1.msra.mxu0 %v273
    %630 = vmatprep.subr.mxu0 %v284
    %631 = vmatpush1.msra.mxu0 %v283
    %632 = vmatprep.subr.mxu0 %v294
    %633 = vmatpush1.msra.mxu0 %v293
    %634 = vmatprep.subr.mxu0 %v304
    %635 = vmatpush1.msra.mxu0 %v303
    %636 = vmatprep.subr.mxu0 %v314
    %637 = vmatpush1.msra.mxu0 %v313
    %638 = vmatprep.subr.mxu0 %v324
    %639 = vmatpush1.msra.mxu0 %v323
    %640 = vmatprep.subr.mxu0 %v334
    %641 = vmatpush1.msra.mxu0 %v333
    %642 = vmatprep.subr.mxu0 %v344
    %643 = vmatpush1.msra.mxu0 %v343
    %644 = vmatprep.subr.mxu0 %v354
    %645 = vmatpush1.msra.mxu0 %v353
    %646 = vmatprep.subr.mxu0 %v364
    %647 = vmatpush1.msra.mxu0 %v363
    %648 = vmatprep.subr.mxu0 %v374
    %649 = vmatpush1.msra.mxu0 %v373
    %650 = vmatprep.mubr.f32.mxu0 %v407
    %651 = vmatmul.mubr.f32.gmra.mrb[0].mxu0 %v399
    %v652 = vpop.f32.mrb[0].mxu0
    %v653 = vadd.f32 0.0, %v652
    %v654 = vpop.f32.mrb[0].mxu0
    %v655 = vadd.f32 0.0, %v654
    %656 = vdwg.mxu0
    %657 = vmatprep.subr.mxu0 %v424
    %658 = vmatpush1.msra.mxu0 %v421
    %659 = vmatprep.subr.mxu0 0.0
    %660 = vmatpush1.msra.mxu0 0.0
    %661 = vmatprep.subr.mxu0 0.0
    %662 = vmatpush1.msra.mxu0 0.0
    %663 = vmatprep.subr.mxu0 0.0
    %664 = vmatpush1.msra.mxu0 0.0
    %665 = vmatprep.subr.mxu0 0.0
    %666 = vmatpush1.msra.mxu0 0.0
    %667 = vmatprep.subr.mxu0 0.0
    %668 = vmatpush1.msra.mxu0 0.0
    %669 = vmatprep.subr.mxu0 0.0
    %670 = vmatpush1.msra.mxu0 0.0
    %671 = vmatprep.subr.mxu0 0.0
    %672 = vmatpush1.msra.mxu0 0.0
    %673 = vmatprep.subr.mxu0 0.0
    %674 = vmatpush1.msra.mxu0 0.0
    %675 = vmatprep.subr.mxu0 0.0
    %676 = vmatpush1.msra.mxu0 0.0
    %677 = vmatprep.subr.mxu0 0.0
    %678 = vmatpush1.msra.mxu0 0.0
    %679 = vmatprep.subr.mxu0 0.0
    %680 = vmatpush1.msra.mxu0 0.0
    %681 = vmatprep.subr.mxu0 0.0
    %682 = vmatpush1.msra.mxu0 0.0
    %683 = vmatprep.subr.mxu0 0.0
    %684 = vmatpush1.msra.mxu0 0.0
    %685 = vmatprep.subr.mxu0 0.0
    %686 = vmatpush1.msra.mxu0 0.0
    %687 = vmatprep.subr.mxu0 0.0
    %688 = vmatpush1.msra.mxu0 0.0
    %689 = vmatprep.subr.mxu0 0.0
    %690 = vmatpush1.msra.mxu0 0.0
    %691 = vmatprep.subr.mxu0 0.0
    %692 = vmatpush1.msra.mxu0 0.0
    %693 = vmatprep.subr.mxu0 0.0
    %694 = vmatpush1.msra.mxu0 0.0
    %695 = vmatprep.subr.mxu0 0.0
    %696 = vmatpush1.msra.mxu0 0.0
    %697 = vmatprep.subr.mxu0 0.0
    %698 = vmatpush1.msra.mxu0 0.0
    %699 = vmatprep.subr.mxu0 0.0
    %700 = vmatpush1.msra.mxu0 0.0
    %701 = vmatprep.subr.mxu0 0.0
    %702 = vmatpush1.msra.mxu0 0.0
    %703 = vmatprep.subr.mxu0 0.0
    %704 = vmatpush1.msra.mxu0 0.0
    %705 = vmatprep.subr.mxu0 0.0
    %706 = vmatpush1.msra.mxu0 0.0
    %707 = vmatprep.subr.mxu0 0.0
    %708 = vmatpush1.msra.mxu0 0.0
    %709 = vmatprep.subr.mxu0 0.0
    %710 = vmatpush1.msra.mxu0 0.0
    %711 = vmatprep.subr.mxu0 0.0
    %712 = vmatpush1.msra.mxu0 0.0
    %713 = vmatprep.subr.mxu0 0.0
    %714 = vmatpush1.msra.mxu0 0.0
    %715 = vmatprep.subr.mxu0 0.0
    %716 = vmatpush1.msra.mxu0 0.0
    %717 = vmatprep.subr.mxu0 0.0
    %718 = vmatpush1.msra.mxu0 0.0
    %719 = vmatprep.subr.mxu0 0.0
    %720 = vmatpush1.msra.mxu0 0.0
    %721 = vmatprep.mubr.f32.mxu0 0.0
    %722 = vmatmul.mubr.f32.gmra.mrb[0].mxu0 %v411
    %v723 = vpop.f32.mrb[0].mxu0
    %v724 = vadd.f32 %v653, %v723
    %v725 = vpop.f32.mrb[0].mxu0
    %v726 = vadd.f32 %v655, %v725
    %727 = vdwg.mxu0
    %728 = vmatprep.subr.mxu0 %v66
    %729 = vmatpush1.msra.mxu0 %v65
    %730 = vmatprep.subr.mxu0 %v76
    %731 = vmatpush1.msra.mxu0 %v75
    %732 = vmatprep.subr.mxu0 %v86
    %733 = vmatpush1.msra.mxu0 %v85
    %734 = vmatprep.subr.mxu0 %v96
    %735 = vmatpush1.msra.mxu0 %v95
    %736 = vmatprep.subr.mxu0 %v106
    %737 = vmatpush1.msra.mxu0 %v105
    %738 = vmatprep.subr.mxu0 %v116
    %739 = vmatpush1.msra.mxu0 %v115
    %740 = vmatprep.subr.mxu0 %v126
    %741 = vmatpush1.msra.mxu0 %v125
    %742 = vmatprep.subr.mxu0 %v136
    %743 = vmatpush1.msra.mxu0 %v135
    %744 = vmatprep.subr.mxu0 %v146
    %745 = vmatpush1.msra.mxu0 %v145
    %746 = vmatprep.subr.mxu0 %v156
    %747 = vmatpush1.msra.mxu0 %v155
    %748 = vmatprep.subr.mxu0 %v166
    %749 = vmatpush1.msra.mxu0 %v165
    %750 = vmatprep.subr.mxu0 %v176
    %751 = vmatpush1.msra.mxu0 %v175
    %752 = vmatprep.subr.mxu0 %v186
    %753 = vmatpush1.msra.mxu0 %v185
    %754 = vmatprep.subr.mxu0 %v196
    %755 = vmatpush1.msra.mxu0 %v195
    %756 = vmatprep.subr.mxu0 %v206
    %757 = vmatpush1.msra.mxu0 %v205
    %758 = vmatprep.subr.mxu0 %v216
    %759 = vmatpush1.msra.mxu0 %v215
    %760 = vmatprep.subr.mxu0 %v226
    %761 = vmatpush1.msra.mxu0 %v225
    %762 = vmatprep.subr.mxu0 %v236
    %763 = vmatpush1.msra.mxu0 %v235
    %764 = vmatprep.subr.mxu0 %v246
    %765 = vmatpush1.msra.mxu0 %v245
    %766 = vmatprep.subr.mxu0 %v256
    %767 = vmatpush1.msra.mxu0 %v255
    %768 = vmatprep.subr.mxu0 %v266
    %769 = vmatpush1.msra.mxu0 %v265
    %770 = vmatprep.subr.mxu0 %v276
    %771 = vmatpush1.msra.mxu0 %v275
    %772 = vmatprep.subr.mxu0 %v286
    %773 = vmatpush1.msra.mxu0 %v285
    %774 = vmatprep.subr.mxu0 %v296
    %775 = vmatpush1.msra.mxu0 %v295
    %776 = vmatprep.subr.mxu0 %v306
    %777 = vmatpush1.msra.mxu0 %v305
    %778 = vmatprep.subr.mxu0 %v316
    %779 = vmatpush1.msra.mxu0 %v315
    %780 = vmatprep.subr.mxu0 %v326
    %781 = vmatpush1.msra.mxu0 %v325
    %782 = vmatprep.subr.mxu0 %v336
    %783 = vmatpush1.msra.mxu0 %v335
    %784 = vmatprep.subr.mxu0 %v346
    %785 = vmatpush1.msra.mxu0 %v345
    %786 = vmatprep.subr.mxu0 %v356
    %787 = vmatpush1.msra.mxu0 %v355
    %788 = vmatprep.subr.mxu0 %v366
    %789 = vmatpush1.msra.mxu0 %v365
    %790 = vmatprep.subr.mxu0 %v376
    %791 = vmatpush1.msra.mxu0 %v375
    %792 = vmatprep.mubr.f32.mxu0 %v407
    %793 = vmatmul.mubr.f32.gmra.mrb[0].mxu0 %v399
    %v794 = vpop.f32.mrb[0].mxu0
    %v795 = vadd.f32 0.0, %v794
    %v796 = vpop.f32.mrb[0].mxu0
    %v797 = vadd.f32 0.0, %v796
    %798 = vdwg.mxu0
    %799 = vmatprep.subr.mxu0 %v430
    %800 = vmatpush1.msra.mxu0 %v427
    %801 = vmatprep.subr.mxu0 0.0
    %802 = vmatpush1.msra.mxu0 0.0
    %803 = vmatprep.subr.mxu0 0.0
    %804 = vmatpush1.msra.mxu0 0.0
    %805 = vmatprep.subr.mxu0 0.0
    %806 = vmatpush1.msra.mxu0 0.0
    %807 = vmatprep.subr.mxu0 0.0
    %808 = vmatpush1.msra.mxu0 0.0
    %809 = vmatprep.subr.mxu0 0.0
    %810 = vmatpush1.msra.mxu0 0.0
    %811 = vmatprep.subr.mxu0 0.0
    %812 = vmatpush1.msra.mxu0 0.0
    %813 = vmatprep.subr.mxu0 0.0
    %814 = vmatpush1.msra.mxu0 0.0
    %815 = vmatprep.subr.mxu0 0.0
    %816 = vmatpush1.msra.mxu0 0.0
    %817 = vmatprep.subr.mxu0 0.0
    %818 = vmatpush1.msra.mxu0 0.0
    %819 = vmatprep.subr.mxu0 0.0
    %820 = vmatpush1.msra.mxu0 0.0
    %821 = vmatprep.subr.mxu0 0.0
    %822 = vmatpush1.msra.mxu0 0.0
    %823 = vmatprep.subr.mxu0 0.0
    %824 = vmatpush1.msra.mxu0 0.0
    %825 = vmatprep.subr.mxu0 0.0
    %826 = vmatpush1.msra.mxu0 0.0
    %827 = vmatprep.subr.mxu0 0.0
    %828 = vmatpush1.msra.mxu0 0.0
    %829 = vmatprep.subr.mxu0 0.0
    %830 = vmatpush1.msra.mxu0 0.0
    %831 = vmatprep.subr.mxu0 0.0
    %832 = vmatpush1.msra.mxu0 0.0
    %833 = vmatprep.subr.mxu0 0.0
    %834 = vmatpush1.msra.mxu0 0.0
    %835 = vmatprep.subr.mxu0 0.0
    %836 = vmatpush1.msra.mxu0 0.0
    %837 = vmatprep.subr.mxu0 0.0
    %838 = vmatpush1.msra.mxu0 0.0
    %839 = vmatprep.subr.mxu0 0.0
    %840 = vmatpush1.msra.mxu0 0.0
    %841 = vmatprep.subr.mxu0 0.0
    %842 = vmatpush1.msra.mxu0 0.0
    %843 = vmatprep.subr.mxu0 0.0
    %844 = vmatpush1.msra.mxu0 0.0
    %845 = vmatprep.subr.mxu0 0.0
    %846 = vmatpush1.msra.mxu0 0.0
    %847 = vmatprep.subr.mxu0 0.0
    %848 = vmatpush1.msra.mxu0 0.0
    %849 = vmatprep.subr.mxu0 0.0
    %850 = vmatpush1.msra.mxu0 0.0
    %851 = vmatprep.subr.mxu0 0.0
    %852 = vmatpush1.msra.mxu0 0.0
    %853 = vmatprep.subr.mxu0 0.0
    %854 = vmatpush1.msra.mxu0 0.0
    %855 = vmatprep.subr.mxu0 0.0
    %856 = vmatpush1.msra.mxu0 0.0
    %857 = vmatprep.subr.mxu0 0.0
    %858 = vmatpush1.msra.mxu0 0.0
    %859 = vmatprep.subr.mxu0 0.0
    %860 = vmatpush1.msra.mxu0 0.0
    %861 = vmatprep.subr.mxu0 0.0
    %862 = vmatpush1.msra.mxu0 0.0
    %863 = vmatprep.mubr.f32.mxu0 0.0
    %864 = vmatmul.mubr.f32.gmra.mrb[0].mxu0 %v411
    %v865 = vpop.f32.mrb[0].mxu0
    %v866 = vadd.f32 %v795, %v865
    %v867 = vpop.f32.mrb[0].mxu0
    %v868 = vadd.f32 %v797, %v867
    %869 = vdwg.mxu0
    %870 = vmatprep.subr.mxu0 %v68
    %871 = vmatpush1.msra.mxu0 %v67
    %872 = vmatprep.subr.mxu0 %v78
    %873 = vmatpush1.msra.mxu0 %v77
    %874 = vmatprep.subr.mxu0 %v88
    %875 = vmatpush1.msra.mxu0 %v87
    %876 = vmatprep.subr.mxu0 %v98
    %877 = vmatpush1.msra.mxu0 %v97
    %878 = vmatprep.subr.mxu0 %v108
    %879 = vmatpush1.msra.mxu0 %v107
    %880 = vmatprep.subr.mxu0 %v118
    %881 = vmatpush1.msra.mxu0 %v117
    %882 = vmatprep.subr.mxu0 %v128
    %883 = vmatpush1.msra.mxu0 %v127
    %884 = vmatprep.subr.mxu0 %v138
    %885 = vmatpush1.msra.mxu0 %v137
    %886 = vmatprep.subr.mxu0 %v148
    %887 = vmatpush1.msra.mxu0 %v147
    %888 = vmatprep.subr.mxu0 %v158
    %889 = vmatpush1.msra.mxu0 %v157
    %890 = vmatprep.subr.mxu0 %v168
    %891 = vmatpush1.msra.mxu0 %v167
    %892 = vmatprep.subr.mxu0 %v178
    %893 = vmatpush1.msra.mxu0 %v177
    %894 = vmatprep.subr.mxu0 %v188
    %895 = vmatpush1.msra.mxu0 %v187
    %896 = vmatprep.subr.mxu0 %v198
    %897 = vmatpush1.msra.mxu0 %v197
    %898 = vmatprep.subr.mxu0 %v208
    %899 = vmatpush1.msra.mxu0 %v207
    %900 = vmatprep.subr.mxu0 %v218
    %901 = vmatpush1.msra.mxu0 %v217
    %902 = vmatprep.subr.mxu0 %v228
    %903 = vmatpush1.msra.mxu0 %v227
    %904 = vmatprep.subr.mxu0 %v238
    %905 = vmatpush1.msra.mxu0 %v237
    %906 = vmatprep.subr.mxu0 %v248
    %907 = vmatpush1.msra.mxu0 %v247
    %908 = vmatprep.subr.mxu0 %v258
    %909 = vmatpush1.msra.mxu0 %v257
    %910 = vmatprep.subr.mxu0 %v268
    %911 = vmatpush1.msra.mxu0 %v267
    %912 = vmatprep.subr.mxu0 %v278
    %913 = vmatpush1.msra.mxu0 %v277
    %914 = vmatprep.subr.mxu0 %v288
    %915 = vmatpush1.msra.mxu0 %v287
    %916 = vmatprep.subr.mxu0 %v298
    %917 = vmatpush1.msra.mxu0 %v297
    %918 = vmatprep.subr.mxu0 %v308
    %919 = vmatpush1.msra.mxu0 %v307
    %920 = vmatprep.subr.mxu0 %v318
    %921 = vmatpush1.msra.mxu0 %v317
    %922 = vmatprep.subr.mxu0 %v328
    %923 = vmatpush1.msra.mxu0 %v327
    %924 = vmatprep.subr.mxu0 %v338
    %925 = vmatpush1.msra.mxu0 %v337
    %926 = vmatprep.subr.mxu0 %v348
    %927 = vmatpush1.msra.mxu0 %v347
    %928 = vmatprep.subr.mxu0 %v358
    %929 = vmatpush1.msra.mxu0 %v357
    %930 = vmatprep.subr.mxu0 %v368
    %931 = vmatpush1.msra.mxu0 %v367
    %932 = vmatprep.subr.mxu0 %v378
    %933 = vmatpush1.msra.mxu0 %v377
    %934 = vmatprep.mubr.f32.mxu0 %v407
    %935 = vmatmul.mubr.f32.gmra.mrb[0].mxu0 %v399
    %v936 = vpop.f32.mrb[0].mxu0
    %v937 = vadd.f32 0.0, %v936
    %v938 = vpop.f32.mrb[0].mxu0
    %v939 = vadd.f32 0.0, %v938
    %940 = vdwg.mxu0
    %941 = vmatprep.subr.mxu0 %v436
    %942 = vmatpush1.msra.mxu0 %v433
    %943 = vmatprep.subr.mxu0 0.0
    %944 = vmatpush1.msra.mxu0 0.0
    %945 = vmatprep.subr.mxu0 0.0
    %946 = vmatpush1.msra.mxu0 0.0
    %947 = vmatprep.subr.mxu0 0.0
    %948 = vmatpush1.msra.mxu0 0.0
    %949 = vmatprep.subr.mxu0 0.0
    %950 = vmatpush1.msra.mxu0 0.0
    %951 = vmatprep.subr.mxu0 0.0
    %952 = vmatpush1.msra.mxu0 0.0
    %953 = vmatprep.subr.mxu0 0.0
    %954 = vmatpush1.msra.mxu0 0.0
    %955 = vmatprep.subr.mxu0 0.0
    %956 = vmatpush1.msra.mxu0 0.0
    %957 = vmatprep.subr.mxu0 0.0
    %958 = vmatpush1.msra.mxu0 0.0
    %959 = vmatprep.subr.mxu0 0.0
    %960 = vmatpush1.msra.mxu0 0.0
    %961 = vmatprep.subr.mxu0 0.0
    %962 = vmatpush1.msra.mxu0 0.0
    %963 = vmatprep.subr.mxu0 0.0
    %964 = vmatpush1.msra.mxu0 0.0
    %965 = vmatprep.subr.mxu0 0.0
    %966 = vmatpush1.msra.mxu0 0.0
    %967 = vmatprep.subr.mxu0 0.0
    %968 = vmatpush1.msra.mxu0 0.0
    %969 = vmatprep.subr.mxu0 0.0
    %970 = vmatpush1.msra.mxu0 0.0
    %971 = vmatprep.subr.mxu0 0.0
    %972 = vmatpush1.msra.mxu0 0.0
    %973 = vmatprep.subr.mxu0 0.0
    %974 = vmatpush1.msra.mxu0 0.0
    %975 = vmatprep.subr.mxu0 0.0
    %976 = vmatpush1.msra.mxu0 0.0
    %977 = vmatprep.subr.mxu0 0.0
    %978 = vmatpush1.msra.mxu0 0.0
    %979 = vmatprep.subr.mxu0 0.0
    %980 = vmatpush1.msra.mxu0 0.0
    %981 = vmatprep.subr.mxu0 0.0
    %982 = vmatpush1.msra.mxu0 0.0
    %983 = vmatprep.subr.mxu0 0.0
    %984 = vmatpush1.msra.mxu0 0.0
    %985 = vmatprep.subr.mxu0 0.0
    %986 = vmatpush1.msra.mxu0 0.0
    %987 = vmatprep.subr.mxu0 0.0
    %988 = vmatpush1.msra.mxu0 0.0
    %989 = vmatprep.subr.mxu0 0.0
    %990 = vmatpush1.msra.mxu0 0.0
    %991 = vmatprep.subr.mxu0 0.0
    %992 = vmatpush1.msra.mxu0 0.0
    %993 = vmatprep.subr.mxu0 0.0
    %994 = vmatpush1.msra.mxu0 0.0
    %995 = vmatprep.subr.mxu0 0.0
    %996 = vmatpush1.msra.mxu0 0.0
    %997 = vmatprep.subr.mxu0 0.0
    %998 = vmatpush1.msra.mxu0 0.0
    %999 = vmatprep.subr.mxu0 0.0
    %1000 = vmatpush1.msra.mxu0 0.0
    %1001 = vmatprep.subr.mxu0 0.0
    %1002 = vmatpush1.msra.mxu0 0.0
    %1003 = vmatprep.subr.mxu0 0.0
    %1004 = vmatpush1.msra.mxu0 0.0
    %1005 = vmatprep.mubr.f32.mxu0 0.0
    %1006 = vmatmul.mubr.f32.gmra.mrb[0].mxu0 %v411
    %v1007 = vpop.f32.mrb[0].mxu0
    %v1008 = vadd.f32 %v937, %v1007
    %v1009 = vpop.f32.mrb[0].mxu0
    %v1010 = vadd.f32 %v939, %v1009
    %1011 = vdwg.mxu0
    %1012 = vmatprep.subr.mxu0 %v70
    %1013 = vmatpush1.msra.mxu0 %v69
    %1014 = vmatprep.subr.mxu0 %v80
    %1015 = vmatpush1.msra.mxu0 %v79
    %1016 = vmatprep.subr.mxu0 %v90
    %1017 = vmatpush1.msra.mxu0 %v89
    %1018 = vmatprep.subr.mxu0 %v100
    %1019 = vmatpush1.msra.mxu0 %v99
    %1020 = vmatprep.subr.mxu0 %v110
    %1021 = vmatpush1.msra.mxu0 %v109
    %1022 = vmatprep.subr.mxu0 %v120
    %1023 = vmatpush1.msra.mxu0 %v119
    %1024 = vmatprep.subr.mxu0 %v130
    %1025 = vmatpush1.msra.mxu0 %v129
    %1026 = vmatprep.subr.mxu0 %v140
    %1027 = vmatpush1.msra.mxu0 %v139
    %1028 = vmatprep.subr.mxu0 %v150
    %1029 = vmatpush1.msra.mxu0 %v149
    %1030 = vmatprep.subr.mxu0 %v160
    %1031 = vmatpush1.msra.mxu0 %v159
    %1032 = vmatprep.subr.mxu0 %v170
    %1033 = vmatpush1.msra.mxu0 %v169
    %1034 = vmatprep.subr.mxu0 %v180
    %1035 = vmatpush1.msra.mxu0 %v179
    %1036 = vmatprep.subr.mxu0 %v190
    %1037 = vmatpush1.msra.mxu0 %v189
    %1038 = vmatprep.subr.mxu0 %v200
    %1039 = vmatpush1.msra.mxu0 %v199
    %1040 = vmatprep.subr.mxu0 %v210
    %1041 = vmatpush1.msra.mxu0 %v209
    %1042 = vmatprep.subr.mxu0 %v220
    %1043 = vmatpush1.msra.mxu0 %v219
    %1044 = vmatprep.subr.mxu0 %v230
    %1045 = vmatpush1.msra.mxu0 %v229
    %1046 = vmatprep.subr.mxu0 %v240
    %1047 = vmatpush1.msra.mxu0 %v239
    %1048 = vmatprep.subr.mxu0 %v250
    %1049 = vmatpush1.msra.mxu0 %v249
    %1050 = vmatprep.subr.mxu0 %v260
    %1051 = vmatpush1.msra.mxu0 %v259
    %1052 = vmatprep.subr.mxu0 %v270
    %1053 = vmatpush1.msra.mxu0 %v269
    %1054 = vmatprep.subr.mxu0 %v280
    %1055 = vmatpush1.msra.mxu0 %v279
    %1056 = vmatprep.subr.mxu0 %v290
    %1057 = vmatpush1.msra.mxu0 %v289
    %1058 = vmatprep.subr.mxu0 %v300
    %1059 = vmatpush1.msra.mxu0 %v299
    %1060 = vmatprep.subr.mxu0 %v310
    %1061 = vmatpush1.msra.mxu0 %v309
    %1062 = vmatprep.subr.mxu0 %v320
    %1063 = vmatpush1.msra.mxu0 %v319
    %1064 = vmatprep.subr.mxu0 %v330
    %1065 = vmatpush1.msra.mxu0 %v329
    %1066 = vmatprep.subr.mxu0 %v340
    %1067 = vmatpush1.msra.mxu0 %v339
    %1068 = vmatprep.subr.mxu0 %v350
    %1069 = vmatpush1.msra.mxu0 %v349
    %1070 = vmatprep.subr.mxu0 %v360
    %1071 = vmatpush1.msra.mxu0 %v359
    %1072 = vmatprep.subr.mxu0 %v370
    %1073 = vmatpush1.msra.mxu0 %v369
    %1074 = vmatprep.subr.mxu0 %v380
    %1075 = vmatpush1.msra.mxu0 %v379
    %1076 = vmatprep.mubr.f32.mxu0 %v407
    %1077 = vmatmul.mubr.f32.gmra.mrb[0].mxu0 %v399
    %v1078 = vpop.f32.mrb[0].mxu0
    %v1079 = vadd.f32 0.0, %v1078
    %v1080 = vpop.f32.mrb[0].mxu0
    %v1081 = vadd.f32 0.0, %v1080
    %1082 = vdwg.mxu0
    %1083 = vmatprep.subr.mxu0 %v442
    %1084 = vmatpush1.msra.mxu0 %v439
    %1085 = vmatprep.subr.mxu0 0.0
    %1086 = vmatpush1.msra.mxu0 0.0
    %1087 = vmatprep.subr.mxu0 0.0
    %1088 = vmatpush1.msra.mxu0 0.0
    %1089 = vmatprep.subr.mxu0 0.0
    %1090 = vmatpush1.msra.mxu0 0.0
    %1091 = vmatprep.subr.mxu0 0.0
    %1092 = vmatpush1.msra.mxu0 0.0
    %1093 = vmatprep.subr.mxu0 0.0
    %1094 = vmatpush1.msra.mxu0 0.0
    %1095 = vmatprep.subr.mxu0 0.0
    %1096 = vmatpush1.msra.mxu0 0.0
    %1097 = vmatprep.subr.mxu0 0.0
    %1098 = vmatpush1.msra.mxu0 0.0
    %1099 = vmatprep.subr.mxu0 0.0
    %1100 = vmatpush1.msra.mxu0 0.0
    %1101 = vmatprep.subr.mxu0 0.0
    %1102 = vmatpush1.msra.mxu0 0.0
    %1103 = vmatprep.subr.mxu0 0.0
    %1104 = vmatpush1.msra.mxu0 0.0
    %1105 = vmatprep.subr.mxu0 0.0
    %1106 = vmatpush1.msra.mxu0 0.0
    %1107 = vmatprep.subr.mxu0 0.0
    %1108 = vmatpush1.msra.mxu0 0.0
    %1109 = vmatprep.subr.mxu0 0.0
    %1110 = vmatpush1.msra.mxu0 0.0
    %1111 = vmatprep.subr.mxu0 0.0
    %1112 = vmatpush1.msra.mxu0 0.0
    %1113 = vmatprep.subr.mxu0 0.0
    %1114 = vmatpush1.msra.mxu0 0.0
    %1115 = vmatprep.subr.mxu0 0.0
    %1116 = vmatpush1.msra.mxu0 0.0
    %1117 = vmatprep.subr.mxu0 0.0
    %1118 = vmatpush1.msra.mxu0 0.0
    %1119 = vmatprep.subr.mxu0 0.0
    %1120 = vmatpush1.msra.mxu0 0.0
    %1121 = vmatprep.subr.mxu0 0.0
    %1122 = vmatpush1.msra.mxu0 0.0
    %1123 = vmatprep.subr.mxu0 0.0
    %1124 = vmatpush1.msra.mxu0 0.0
    %1125 = vmatprep.subr.mxu0 0.0
    %1126 = vmatpush1.msra.mxu0 0.0
    %1127 = vmatprep.subr.mxu0 0.0
    %1128 = vmatpush1.msra.mxu0 0.0
    %1129 = vmatprep.subr.mxu0 0.0
    %1130 = vmatpush1.msra.mxu0 0.0
    %1131 = vmatprep.subr.mxu0 0.0
    %1132 = vmatpush1.msra.mxu0 0.0
    %1133 = vmatprep.subr.mxu0 0.0
    %1134 = vmatpush1.msra.mxu0 0.0
    %1135 = vmatprep.subr.mxu0 0.0
    %1136 = vmatpush1.msra.mxu0 0.0
    %1137 = vmatprep.subr.mxu0 0.0
    %1138 = vmatpush1.msra.mxu0 0.0
    %1139 = vmatprep.subr.mxu0 0.0
    %1140 = vmatpush1.msra.mxu0 0.0
    %1141 = vmatprep.subr.mxu0 0.0
    %1142 = vmatpush1.msra.mxu0 0.0
    %1143 = vmatprep.subr.mxu0 0.0
    %1144 = vmatpush1.msra.mxu0 0.0
    %1145 = vmatprep.subr.mxu0 0.0
    %1146 = vmatpush1.msra.mxu0 0.0
    %1147 = vmatprep.mubr.f32.mxu0 0.0
    %1148 = vmatmul.mubr.f32.gmra.mrb[0].mxu0 %v411
    %v1149 = vpop.f32.mrb[0].mxu0
    %v1150 = vadd.f32 %v1079, %v1149
    %v1151 = vpop.f32.mrb[0].mxu0
    %v1152 = vadd.f32 %v1081, %v1151
    %1153 = vdwg.mxu0
    %v1154 = vmul.f32 %v582, %v582
    %v1155 = vmul.f32 %v584, %v584
    %v1156 = vmul.f32 %v724, %v724
    %v1157 = vmul.f32 %v726, %v726
    %v1158 = vmul.f32 %v866, %v866
    %v1159 = vmul.f32 %v868, %v868
    %v1160 = vmul.f32 %v1008, %v1008
    %v1161 = vmul.f32 %v1010, %v1010
    %v1162 = vmul.f32 %v1150, %v1150
    %v1163 = vmul.f32 %v1152, %v1152
    %v1164 = vadd.f32 %v1154, %v1159
    %v1165 = vadd.f32 %v1155, %v1160
    %v1166 = vadd.f32 %v1156, %v1161
    %v1167 = vadd.f32 %v1157, %v1162
    %v1168 = vadd.f32 %v1158, %v1163
    %v1169 = vld [vmem:[#allocation5] sm:$0xff]
    %v1170 = vld [vmem:[#allocation5 + $0x8] sm:$0xff]
    %v1171 = vld [vmem:[#allocation5 + $0x10] sm:$0xff]
    %v1172 = vld [vmem:[#allocation5 + $0x18] sm:$0xff]
    %v1173 = vld [vmem:[#allocation5 + $0x20] sm:$0xff]
    %v1174 = vld [vmem:[#allocation5 + $0x28] sm:$0xff]
    %v1175 = vld [vmem:[#allocation5 + $0x30] sm:$0xff]
    %v1176 = vld [vmem:[#allocation5 + $0x38] sm:$0xff]
    %v1177 = vld [vmem:[#allocation5 + $0x40] sm:$0xff]
    %v1178 = vld [vmem:[#allocation5 + $0x48] sm:$0xff]
    %v1179 = vld [vmem:[#allocation5 + $0x50] sm:$0xff]
    %v1180 = vld [vmem:[#allocation5 + $0x58] sm:$0xff]
    %v1181 = vld [vmem:[#allocation5 + $0x60] sm:$0xff]
    %v1182 = vld [vmem:[#allocation5 + $0x68] sm:$0xff]
    %v1183 = vld [vmem:[#allocation5 + $0x70] sm:$0xff]
    %v1184 = vld [vmem:[#allocation5 + $0x78] sm:$0xff]
    %v1185 = vld [vmem:[#allocation5 + $0x80] sm:$0xff]
    %v1186 = vld [vmem:[#allocation5 + $0x88] sm:$0xff]
    %v1187 = vld [vmem:[#allocation5 + $0x90] sm:$0xff]
    %v1188 = vld [vmem:[#allocation5 + $0x98] sm:$0xff]
    %v1189 = vld [vmem:[#allocation5 + $0xa0] sm:$0xff]
    %v1190 = vld [vmem:[#allocation5 + $0xa8] sm:$0xff]
    %v1191 = vld [vmem:[#allocation5 + $0xb0] sm:$0xff]
    %v1192 = vld [vmem:[#allocation5 + $0xb8] sm:$0xff]
    %v1193 = vld [vmem:[#allocation5 + $0xc0] sm:$0xff]
    %v1194 = vld [vmem:[#allocation5 + $0xc8] sm:$0xff]
    %v1195 = vld [vmem:[#allocation5 + $0xd0] sm:$0xff]
    %v1196 = vld [vmem:[#allocation5 + $0xd8] sm:$0xff]
    %v1197 = vld [vmem:[#allocation5 + $0xe0] sm:$0xff]
    %v1198 = vld [vmem:[#allocation5 + $0xe8] sm:$0xff]
    %v1199 = vld [vmem:[#allocation5 + $0xf0] sm:$0xff]
    %v1200 = vld [vmem:[#allocation5 + $0xf8] sm:$0xff]
    %v1201 = vld [vmem:[#allocation5 + $0x100] sm:$0xff]
    %v1202 = vld [vmem:[#allocation5 + $0x108] sm:$0xff]
    %v1203 = vld [vmem:[#allocation5 + $0x110] sm:$0xff]
    %v1204 = vld [vmem:[#allocation5 + $0x118] sm:$0xff]
    %v1205 = vld [vmem:[#allocation5 + $0x120] sm:$0xff]
    %v1206 = vld [vmem:[#allocation5 + $0x128] sm:$0xff]
    %v1207 = vld [vmem:[#allocation5 + $0x130] sm:$0xff]
    %v1208 = vld [vmem:[#allocation5 + $0x138] sm:$0xff]
    %v1209 = vld [vmem:[#allocation5 + $0x140] sm:$0xff]
    %v1210 = vld [vmem:[#allocation5 + $0x148] sm:$0xff]
    %v1211 = vld [vmem:[#allocation5 + $0x150] sm:$0xff]
    %v1212 = vld [vmem:[#allocation5 + $0x158] sm:$0xff]
    %v1213 = vld [vmem:[#allocation5 + $0x160] sm:$0xff]
    %v1214 = vld [vmem:[#allocation5 + $0x168] sm:$0xff]
    %v1215 = vld [vmem:[#allocation5 + $0x170] sm:$0xff]
    %v1216 = vld [vmem:[#allocation5 + $0x178] sm:$0xff]
    %v1217 = vld [vmem:[#allocation5 + $0x180] sm:$0xff]
    %v1218 = vld [vmem:[#allocation5 + $0x188] sm:$0xff]
    %v1219 = vld [vmem:[#allocation5 + $0x190] sm:$0xff]
    %v1220 = vld [vmem:[#allocation5 + $0x198] sm:$0xff]
    %v1221 = vld [vmem:[#allocation5 + $0x1a0] sm:$0xff]
    %v1222 = vld [vmem:[#allocation5 + $0x1a8] sm:$0xff]
    %v1223 = vld [vmem:[#allocation5 + $0x1b0] sm:$0xff]
    %v1224 = vld [vmem:[#allocation5 + $0x1b8] sm:$0xff]
    %v1225 = vld [vmem:[#allocation5 + $0x1c0] sm:$0xff]
    %v1226 = vld [vmem:[#allocation5 + $0x1c8] sm:$0xff]
    %v1227 = vld [vmem:[#allocation5 + $0x1d0] sm:$0xff]
    %v1228 = vld [vmem:[#allocation5 + $0x1d8] sm:$0xff]
    %v1229 = vld [vmem:[#allocation5 + $0x1e0] sm:$0xff]
    %v1230 = vld [vmem:[#allocation5 + $0x1e8] sm:$0xff]
    %v1231 = vld [vmem:[#allocation5 + $0x1f0] sm:$0xff]
    %v1232 = vld [vmem:[#allocation5 + $0x1f8] sm:$0xff]
    %v1233 = vld [vmem:[#allocation5 + $0x200] sm:$0xff]
    %v1234 = vld [vmem:[#allocation5 + $0x208] sm:$0xff]
    %v1235 = vld [vmem:[#allocation5 + $0x210] sm:$0xff]
    %v1236 = vld [vmem:[#allocation5 + $0x218] sm:$0xff]
    %v1237 = vld [vmem:[#allocation5 + $0x220] sm:$0xff]
    %v1238 = vld [vmem:[#allocation5 + $0x228] sm:$0xff]
    %v1239 = vld [vmem:[#allocation5 + $0x230] sm:$0xff]
    %v1240 = vld [vmem:[#allocation5 + $0x238] sm:$0xff]
    %v1241 = vld [vmem:[#allocation5 + $0x240] sm:$0xff]
    %v1242 = vld [vmem:[#allocation5 + $0x248] sm:$0xff]
    %v1243 = vld [vmem:[#allocation5 + $0x250] sm:$0xff]
    %v1244 = vld [vmem:[#allocation5 + $0x258] sm:$0xff]
    %v1245 = vld [vmem:[#allocation5 + $0x260] sm:$0xff]
    %v1246 = vld [vmem:[#allocation5 + $0x268] sm:$0xff]
    %v1247 = vld [vmem:[#allocation5 + $0x270] sm:$0xff]
    %v1248 = vld [vmem:[#allocation5 + $0x278] sm:$0xff]
    %v1249 = vld [vmem:[#allocation5 + $0x280] sm:$0xff]
    %v1250 = vld [vmem:[#allocation5 + $0x288] sm:$0xff]
    %v1251 = vld [vmem:[#allocation5 + $0x290] sm:$0xff]
    %v1252 = vld [vmem:[#allocation5 + $0x298] sm:$0xff]
    %v1253 = vld [vmem:[#allocation5 + $0x2a0] sm:$0xff]
    %v1254 = vld [vmem:[#allocation5 + $0x2a8] sm:$0xff]
    %v1255 = vld [vmem:[#allocation5 + $0x2b0] sm:$0xff]
    %v1256 = vld [vmem:[#allocation5 + $0x2b8] sm:$0xff]
    %v1257 = vld [vmem:[#allocation5 + $0x2c0] sm:$0xff]
    %v1258 = vld [vmem:[#allocation5 + $0x2c8] sm:$0xff]
    %v1259 = vld [vmem:[#allocation5 + $0x2d0] sm:$0xff]
    %v1260 = vld [vmem:[#allocation5 + $0x2d8] sm:$0xff]
    %v1261 = vld [vmem:[#allocation5 + $0x2e0] sm:$0xff]
    %v1262 = vld [vmem:[#allocation5 + $0x2e8] sm:$0xff]
    %v1263 = vld [vmem:[#allocation5 + $0x2f0] sm:$0xff]
    %v1264 = vld [vmem:[#allocation5 + $0x2f8] sm:$0xff]
    %v1265 = vld [vmem:[#allocation5 + $0x300] sm:$0xff]
    %v1266 = vld [vmem:[#allocation5 + $0x308] sm:$0xff]
    %v1267 = vld [vmem:[#allocation5 + $0x310] sm:$0xff]
    %v1268 = vld [vmem:[#allocation5 + $0x318] sm:$0xff]
    %v1269 = vld [vmem:[#allocation5 + $0x320] sm:$0xff]
    %v1270 = vld [vmem:[#allocation5 + $0x328] sm:$0xff]
    %v1271 = vld [vmem:[#allocation5 + $0x330] sm:$0xff]
    %v1272 = vld [vmem:[#allocation5 + $0x338] sm:$0xff]
    %v1273 = vld [vmem:[#allocation5 + $0x340] sm:$0xff]
    %v1274 = vld [vmem:[#allocation5 + $0x348] sm:$0xff]
    %v1275 = vld [vmem:[#allocation5 + $0x350] sm:$0xff]
    %v1276 = vld [vmem:[#allocation5 + $0x358] sm:$0xff]
    %v1277 = vld [vmem:[#allocation5 + $0x360] sm:$0xff]
    %v1278 = vld [vmem:[#allocation5 + $0x368] sm:$0xff]
    %v1279 = vld [vmem:[#allocation5 + $0x370] sm:$0xff]
    %v1280 = vld [vmem:[#allocation5 + $0x378] sm:$0xff]
    %v1281 = vld [vmem:[#allocation5 + $0x380] sm:$0xff]
    %v1282 = vld [vmem:[#allocation5 + $0x388] sm:$0xff]
    %v1283 = vld [vmem:[#allocation5 + $0x390] sm:$0xff]
    %v1284 = vld [vmem:[#allocation5 + $0x398] sm:$0xff]
    %v1285 = vld [vmem:[#allocation5 + $0x3a0] sm:$0xff]
    %v1286 = vld [vmem:[#allocation5 + $0x3a8] sm:$0xff]
    %v1287 = vld [vmem:[#allocation5 + $0x3b0] sm:$0xff]
    %v1288 = vld [vmem:[#allocation5 + $0x3b8] sm:$0xff]
    %v1289 = vld [vmem:[#allocation5 + $0x3c0] sm:$0xff]
    %v1290 = vld [vmem:[#allocation5 + $0x3c8] sm:$0xff]
    %v1291 = vld [vmem:[#allocation5 + $0x3d0] sm:$0xff]
    %v1292 = vld [vmem:[#allocation5 + $0x3d8] sm:$0xff]
    %v1293 = vld [vmem:[#allocation5 + $0x3e0] sm:$0xff]
    %v1294 = vld [vmem:[#allocation5 + $0x3e8] sm:$0xff]
    %v1295 = vld [vmem:[#allocation5 + $0x3f0] sm:$0xff]
    %v1296 = vld [vmem:[#allocation5 + $0x3f8] sm:$0xff]
    %v1297 = vld [vmem:[#allocation5 + $0x400] sm:$0xff]
    %v1298 = vld [vmem:[#allocation5 + $0x408] sm:$0xff]
    %v1299 = vld [vmem:[#allocation5 + $0x410] sm:$0xff]
    %v1300 = vld [vmem:[#allocation5 + $0x418] sm:$0xff]
    %v1301 = vld [vmem:[#allocation5 + $0x420] sm:$0xff]
    %v1302 = vld [vmem:[#allocation5 + $0x428] sm:$0xff]
    %v1303 = vld [vmem:[#allocation5 + $0x430] sm:$0xff]
    %v1304 = vld [vmem:[#allocation5 + $0x438] sm:$0xff]
    %v1305 = vld [vmem:[#allocation5 + $0x440] sm:$0xff]
    %v1306 = vld [vmem:[#allocation5 + $0x448] sm:$0xff]
    %v1307 = vld [vmem:[#allocation5 + $0x450] sm:$0xff]
    %v1308 = vld [vmem:[#allocation5 + $0x458] sm:$0xff]
    %v1309 = vld [vmem:[#allocation5 + $0x460] sm:$0xff]
    %v1310 = vld [vmem:[#allocation5 + $0x468] sm:$0xff]
    %v1311 = vld [vmem:[#allocation5 + $0x470] sm:$0xff]
    %v1312 = vld [vmem:[#allocation5 + $0x478] sm:$0xff]
    %v1313 = vld [vmem:[#allocation5 + $0x480] sm:$0xff]
    %v1314 = vld [vmem:[#allocation5 + $0x488] sm:$0xff]
    %v1315 = vld [vmem:[#allocation5 + $0x490] sm:$0xff]
    %v1316 = vld [vmem:[#allocation5 + $0x498] sm:$0xff]
    %v1317 = vld [vmem:[#allocation5 + $0x4a0] sm:$0xff]
    %v1318 = vld [vmem:[#allocation5 + $0x4a8] sm:$0xff]
    %v1319 = vld [vmem:[#allocation5 + $0x4b0] sm:$0xff]
    %v1320 = vld [vmem:[#allocation5 + $0x4b8] sm:$0xff]
    %v1321 = vld [vmem:[#allocation5 + $0x4c0] sm:$0xff]
    %v1322 = vld [vmem:[#allocation5 + $0x4c8] sm:$0xff]
    %v1323 = vld [vmem:[#allocation5 + $0x4d0] sm:$0xff]
    %v1324 = vld [vmem:[#allocation5 + $0x4d8] sm:$0xff]
    %v1325 = vld [vmem:[#allocation5 + $0x4e0] sm:$0xff]
    %v1326 = vld [vmem:[#allocation5 + $0x4e8] sm:$0xff]
    %v1327 = vld [vmem:[#allocation5 + $0x4f0] sm:$0xff]
    %v1328 = vld [vmem:[#allocation5 + $0x4f8] sm:$0xff]
    %v1329 = vld [vmem:[#allocation5 + $0x500] sm:$0xff]
    %v1330 = vld [vmem:[#allocation5 + $0x508] sm:$0xff]
    %v1331 = vld [vmem:[#allocation5 + $0x510] sm:$0xff]
    %v1332 = vld [vmem:[#allocation5 + $0x518] sm:$0xff]
    %v1333 = vld [vmem:[#allocation5 + $0x520] sm:$0xff]
    %v1334 = vld [vmem:[#allocation5 + $0x528] sm:$0xff]
    %v1335 = vld [vmem:[#allocation5 + $0x530] sm:$0xff]
    %v1336 = vld [vmem:[#allocation5 + $0x538] sm:$0xff]
    %v1337 = vld [vmem:[#allocation5 + $0x540] sm:$0xff]
    %v1338 = vld [vmem:[#allocation5 + $0x548] sm:$0xff]
    %v1339 = vld [vmem:[#allocation5 + $0x550] sm:$0xff]
    %v1340 = vld [vmem:[#allocation5 + $0x558] sm:$0xff]
    %v1341 = vld [vmem:[#allocation5 + $0x560] sm:$0xff]
    %v1342 = vld [vmem:[#allocation5 + $0x568] sm:$0xff]
    %v1343 = vld [vmem:[#allocation5 + $0x570] sm:$0xff]
    %v1344 = vld [vmem:[#allocation5 + $0x578] sm:$0xff]
    %v1345 = vld [vmem:[#allocation5 + $0x580] sm:$0xff]
    %v1346 = vld [vmem:[#allocation5 + $0x588] sm:$0xff]
    %v1347 = vld [vmem:[#allocation5 + $0x590] sm:$0xff]
    %v1348 = vld [vmem:[#allocation5 + $0x598] sm:$0xff]
    %v1349 = vld [vmem:[#allocation5 + $0x5a0] sm:$0xff]
    %v1350 = vld [vmem:[#allocation5 + $0x5a8] sm:$0xff]
    %v1351 = vld [vmem:[#allocation5 + $0x5b0] sm:$0xff]
    %v1352 = vld [vmem:[#allocation5 + $0x5b8] sm:$0xff]
    %v1353 = vld [vmem:[#allocation5 + $0x5c0] sm:$0xff]
    %v1354 = vld [vmem:[#allocation5 + $0x5c8] sm:$0xff]
    %v1355 = vld [vmem:[#allocation5 + $0x5d0] sm:$0xff]
    %v1356 = vld [vmem:[#allocation5 + $0x5d8] sm:$0xff]
    %v1357 = vld [vmem:[#allocation5 + $0x5e0] sm:$0xff]
    %v1358 = vld [vmem:[#allocation5 + $0x5e8] sm:$0xff]
    %v1359 = vld [vmem:[#allocation5 + $0x5f0] sm:$0xff]
    %v1360 = vld [vmem:[#allocation5 + $0x5f8] sm:$0xff]
    %v1361 = vld [vmem:[#allocation5 + $0x600] sm:$0xff]
    %v1362 = vld [vmem:[#allocation5 + $0x608] sm:$0xff]
    %v1363 = vld [vmem:[#allocation5 + $0x610] sm:$0xff]
    %v1364 = vld [vmem:[#allocation5 + $0x618] sm:$0xff]
    %v1365 = vld [vmem:[#allocation5 + $0x620] sm:$0xff]
    %v1366 = vld [vmem:[#allocation5 + $0x628] sm:$0xff]
    %v1367 = vld [vmem:[#allocation5 + $0x630] sm:$0xff]
    %v1368 = vld [vmem:[#allocation5 + $0x638] sm:$0xff]
    %v1369 = vld [vmem:[#allocation5 + $0x640] sm:$0xff]
    %v1370 = vld [vmem:[#allocation5 + $0x648] sm:$0xff]
    %v1371 = vld [vmem:[#allocation5 + $0x650] sm:$0xff]
    %v1372 = vld [vmem:[#allocation5 + $0x658] sm:$0xff]
    %v1373 = vld [vmem:[#allocation5 + $0x660] sm:$0xff]
    %v1374 = vld [vmem:[#allocation5 + $0x668] sm:$0xff]
    %v1375 = vld [vmem:[#allocation5 + $0x670] sm:$0xff]
    %v1376 = vld [vmem:[#allocation5 + $0x678] sm:$0xff]
    %v1377 = vld [vmem:[#allocation5 + $0x680] sm:$0xff]
    %v1378 = vld [vmem:[#allocation5 + $0x688] sm:$0xff]
    %v1379 = vld [vmem:[#allocation5 + $0x690] sm:$0xff]
    %v1380 = vld [vmem:[#allocation5 + $0x698] sm:$0xff]
    %v1381 = vld [vmem:[#allocation5 + $0x6a0] sm:$0xff]
    %v1382 = vld [vmem:[#allocation5 + $0x6a8] sm:$0xff]
    %v1383 = vld [vmem:[#allocation5 + $0x6b0] sm:$0xff]
    %v1384 = vld [vmem:[#allocation5 + $0x6b8] sm:$0xff]
    %v1385 = vld [vmem:[#allocation5 + $0x6c0] sm:$0xff]
    %v1386 = vld [vmem:[#allocation5 + $0x6c8] sm:$0xff]
    %v1387 = vld [vmem:[#allocation5 + $0x6d0] sm:$0xff]
    %v1388 = vld [vmem:[#allocation5 + $0x6d8] sm:$0xff]
    %v1389 = vld [vmem:[#allocation5 + $0x6e0] sm:$0xff]
    %v1390 = vld [vmem:[#allocation5 + $0x6e8] sm:$0xff]
    %v1391 = vld [vmem:[#allocation5 + $0x6f0] sm:$0xff]
    %v1392 = vld [vmem:[#allocation5 + $0x6f8] sm:$0xff]
    %v1393 = vld [vmem:[#allocation5 + $0x700] sm:$0xff]
    %v1394 = vld [vmem:[#allocation5 + $0x708] sm:$0xff]
    %v1395 = vld [vmem:[#allocation5 + $0x710] sm:$0xff]
    %v1396 = vld [vmem:[#allocation5 + $0x718] sm:$0xff]
    %v1397 = vld [vmem:[#allocation5 + $0x720] sm:$0xff]
    %v1398 = vld [vmem:[#allocation5 + $0x728] sm:$0xff]
    %v1399 = vld [vmem:[#allocation5 + $0x730] sm:$0xff]
    %v1400 = vld [vmem:[#allocation5 + $0x738] sm:$0xff]
    %v1401 = vld [vmem:[#allocation5 + $0x740] sm:$0xff]
    %v1402 = vld [vmem:[#allocation5 + $0x748] sm:$0xff]
    %v1403 = vld [vmem:[#allocation5 + $0x750] sm:$0xff]
    %v1404 = vld [vmem:[#allocation5 + $0x758] sm:$0xff]
    %v1405 = vld [vmem:[#allocation5 + $0x760] sm:$0xff]
    %v1406 = vld [vmem:[#allocation5 + $0x768] sm:$0xff]
    %v1407 = vld [vmem:[#allocation5 + $0x770] sm:$0xff]
    %v1408 = vld [vmem:[#allocation5 + $0x778] sm:$0xff]
    %1409 = vmatprep.subr.mxu0 %v1170
    %1410 = vmatpush1.msra.mxu0 %v1169
    %1411 = vmatprep.subr.mxu0 %v1173
    %1412 = vmatpush1.msra.mxu0 %v1172
    %1413 = vmatprep.subr.mxu0 %v1176
    %1414 = vmatpush1.msra.mxu0 %v1175
    %1415 = vmatprep.subr.mxu0 %v1179
    %1416 = vmatpush1.msra.mxu0 %v1178
    %1417 = vmatprep.subr.mxu0 %v1182
    %1418 = vmatpush1.msra.mxu0 %v1181
    %1419 = vmatprep.subr.mxu0 %v1185
    %1420 = vmatpush1.msra.mxu0 %v1184
    %1421 = vmatprep.subr.mxu0 %v1188
    %1422 = vmatpush1.msra.mxu0 %v1187
    %1423 = vmatprep.subr.mxu0 %v1191
    %1424 = vmatpush1.msra.mxu0 %v1190
    %1425 = vmatprep.subr.mxu0 %v1194
    %1426 = vmatpush1.msra.mxu0 %v1193
    %1427 = vmatprep.subr.mxu0 %v1197
    %1428 = vmatpush1.msra.mxu0 %v1196
    %1429 = vmatprep.subr.mxu0 %v1200
    %1430 = vmatpush1.msra.mxu0 %v1199
    %1431 = vmatprep.subr.mxu0 %v1203
    %1432 = vmatpush1.msra.mxu0 %v1202
    %1433 = vmatprep.subr.mxu0 %v1206
    %1434 = vmatpush1.msra.mxu0 %v1205
    %1435 = vmatprep.subr.mxu0 %v1209
    %1436 = vmatpush1.msra.mxu0 %v1208
    %1437 = vmatprep.subr.mxu0 %v1212
    %1438 = vmatpush1.msra.mxu0 %v1211
    %1439 = vmatprep.subr.mxu0 %v1215
    %1440 = vmatpush1.msra.mxu0 %v1214
    %1441 = vmatprep.subr.mxu0 %v1218
    %1442 = vmatpush1.msra.mxu0 %v1217
    %1443 = vmatprep.subr.mxu0 %v1221
    %1444 = vmatpush1.msra.mxu0 %v1220
    %1445 = vmatprep.subr.mxu0 %v1224
    %1446 = vmatpush1.msra.mxu0 %v1223
    %1447 = vmatprep.subr.mxu0 %v1227
    %1448 = vmatpush1.msra.mxu0 %v1226
    %1449 = vmatprep.subr.mxu0 %v1230
    %1450 = vmatpush1.msra.mxu0 %v1229
    %1451 = vmatprep.subr.mxu0 %v1233
    %1452 = vmatpush1.msra.mxu0 %v1232
    %1453 = vmatprep.subr.mxu0 %v1236
    %1454 = vmatpush1.msra.mxu0 %v1235
    %1455 = vmatprep.subr.mxu0 %v1239
    %1456 = vmatpush1.msra.mxu0 %v1238
    %1457 = vmatprep.subr.mxu0 %v1242
    %1458 = vmatpush1.msra.mxu0 %v1241
    %1459 = vmatprep.subr.mxu0 %v1245
    %1460 = vmatpush1.msra.mxu0 %v1244
    %1461 = vmatprep.subr.mxu0 %v1248
    %1462 = vmatpush1.msra.mxu0 %v1247
    %1463 = vmatprep.subr.mxu0 %v1251
    %1464 = vmatpush1.msra.mxu0 %v1250
    %1465 = vmatprep.subr.mxu0 %v1254
    %1466 = vmatpush1.msra.mxu0 %v1253
    %1467 = vmatprep.subr.mxu0 %v1257
    %1468 = vmatpush1.msra.mxu0 %v1256
    %1469 = vmatprep.subr.mxu0 %v1260
    %1470 = vmatpush1.msra.mxu0 %v1259
    %1471 = vmatprep.subr.mxu0 %v1263
    %1472 = vmatpush1.msra.mxu0 %v1262
    %1473 = vmatprep.mubr.f32.mxu0 %v1165
    %1474 = vmatmul.mubr.f32.gmra.mrb[0].mxu0 %v1164
    %v1475 = vpop.f32.mrb[0].mxu0
    %v1476 = vadd.f32 1e-05, %v1475
    %v1477 = vpop.f32.mrb[0].mxu0
    %v1478 = vadd.f32 1e-05, %v1477
    %1479 = vdwg.mxu0
    %1480 = vmatprep.subr.mxu0 %v1266
    %1481 = vmatpush1.msra.mxu0 %v1265
    %1482 = vmatprep.subr.mxu0 %v1269
    %1483 = vmatpush1.msra.mxu0 %v1268
    %1484 = vmatprep.subr.mxu0 %v1272
    %1485 = vmatpush1.msra.mxu0 %v1271
    %1486 = vmatprep.subr.mxu0 %v1275
    %1487 = vmatpush1.msra.mxu0 %v1274
    %1488 = vmatprep.subr.mxu0 %v1278
    %1489 = vmatpush1.msra.mxu0 %v1277
    %1490 = vmatprep.subr.mxu0 %v1281
    %1491 = vmatpush1.msra.mxu0 %v1280
    %1492 = vmatprep.subr.mxu0 %v1284
    %1493 = vmatpush1.msra.mxu0 %v1283
    %1494 = vmatprep.subr.mxu0 %v1287
    %1495 = vmatpush1.msra.mxu0 %v1286
    %1496 = vmatprep.subr.mxu0 %v1290
    %1497 = vmatpush1.msra.mxu0 %v1289
    %1498 = vmatprep.subr.mxu0 %v1293
    %1499 = vmatpush1.msra.mxu0 %v1292
    %1500 = vmatprep.subr.mxu0 %v1296
    %1501 = vmatpush1.msra.mxu0 %v1295
    %1502 = vmatprep.subr.mxu0 %v1299
    %1503 = vmatpush1.msra.mxu0 %v1298
    %1504 = vmatprep.subr.mxu0 %v1302
    %1505 = vmatpush1.msra.mxu0 %v1301
    %1506 = vmatprep.subr.mxu0 %v1305
    %1507 = vmatpush1.msra.mxu0 %v1304
    %1508 = vmatprep.subr.mxu0 %v1308
    %1509 = vmatpush1.msra.mxu0 %v1307
    %1510 = vmatprep.subr.mxu0 %v1311
    %1511 = vmatpush1.msra.mxu0 %v1310
    %1512 = vmatprep.subr.mxu0 %v1314
    %1513 = vmatpush1.msra.mxu0 %v1313
    %1514 = vmatprep.subr.mxu0 %v1317
    %1515 = vmatpush1.msra.mxu0 %v1316
    %1516 = vmatprep.subr.mxu0 %v1320
    %1517 = vmatpush1.msra.mxu0 %v1319
    %1518 = vmatprep.subr.mxu0 %v1323
    %1519 = vmatpush1.msra.mxu0 %v1322
    %1520 = vmatprep.subr.mxu0 %v1326
    %1521 = vmatpush1.msra.mxu0 %v1325
    %1522 = vmatprep.subr.mxu0 %v1329
    %1523 = vmatpush1.msra.mxu0 %v1328
    %1524 = vmatprep.subr.mxu0 %v1332
    %1525 = vmatpush1.msra.mxu0 %v1331
    %1526 = vmatprep.subr.mxu0 %v1335
    %1527 = vmatpush1.msra.mxu0 %v1334
    %1528 = vmatprep.subr.mxu0 %v1338
    %1529 = vmatpush1.msra.mxu0 %v1337
    %1530 = vmatprep.subr.mxu0 %v1341
    %1531 = vmatpush1.msra.mxu0 %v1340
    %1532 = vmatprep.subr.mxu0 %v1344
    %1533 = vmatpush1.msra.mxu0 %v1343
    %1534 = vmatprep.subr.mxu0 %v1347
    %1535 = vmatpush1.msra.mxu0 %v1346
    %1536 = vmatprep.subr.mxu0 %v1350
    %1537 = vmatpush1.msra.mxu0 %v1349
    %1538 = vmatprep.subr.mxu0 %v1353
    %1539 = vmatpush1.msra.mxu0 %v1352
    %1540 = vmatprep.subr.mxu0 %v1356
    %1541 = vmatpush1.msra.mxu0 %v1355
    %1542 = vmatprep.subr.mxu0 %v1359
    %1543 = vmatpush1.msra.mxu0 %v1358
    %1544 = vmatprep.mubr.f32.mxu0 %v1167
    %1545 = vmatmul.mubr.f32.gmra.mrb[0].mxu0 %v1166
    %v1546 = vpop.f32.mrb[0].mxu0
    %v1547 = vadd.f32 %v1476, %v1546
    %v1548 = vpop.f32.mrb[0].mxu0
    %v1549 = vadd.f32 %v1478, %v1548
    %1550 = vdwg.mxu0
    %1551 = vmatprep.subr.mxu0 %v1362
    %1552 = vmatpush1.msra.mxu0 %v1361
    %1553 = vmatprep.subr.mxu0 %v1365
    %1554 = vmatpush1.msra.mxu0 %v1364
    %1555 = vmatprep.subr.mxu0 %v1368
    %1556 = vmatpush1.msra.mxu0 %v1367
    %1557 = vmatprep.subr.mxu0 %v1371
    %1558 = vmatpush1.msra.mxu0 %v1370
    %1559 = vmatprep.subr.mxu0 %v1374
    %1560 = vmatpush1.msra.mxu0 %v1373
    %1561 = vmatprep.subr.mxu0 %v1377
    %1562 = vmatpush1.msra.mxu0 %v1376
    %1563 = vmatprep.subr.mxu0 %v1380
    %1564 = vmatpush1.msra.mxu0 %v1379
    %1565 = vmatprep.subr.mxu0 %v1383
    %1566 = vmatpush1.msra.mxu0 %v1382
    %1567 = vmatprep.subr.mxu0 %v1386
    %1568 = vmatpush1.msra.mxu0 %v1385
    %1569 = vmatprep.subr.mxu0 %v1389
    %1570 = vmatpush1.msra.mxu0 %v1388
    %1571 = vmatprep.subr.mxu0 %v1392
    %1572 = vmatpush1.msra.mxu0 %v1391
    %1573 = vmatprep.subr.mxu0 %v1395
    %1574 = vmatpush1.msra.mxu0 %v1394
    %1575 = vmatprep.subr.mxu0 %v1398
    %1576 = vmatpush1.msra.mxu0 %v1397
    %1577 = vmatprep.subr.mxu0 %v1401
    %1578 = vmatpush1.msra.mxu0 %v1400
    %1579 = vmatprep.subr.mxu0 %v1404
    %1580 = vmatpush1.msra.mxu0 %v1403
    %1581 = vmatprep.subr.mxu0 %v1407
    %1582 = vmatpush1.msra.mxu0 %v1406
    %1583 = vmatprep.subr.mxu0 0.0
    %1584 = vmatpush1.msra.mxu0 0.0
    %1585 = vmatprep.subr.mxu0 0.0
    %1586 = vmatpush1.msra.mxu0 0.0
    %1587 = vmatprep.subr.mxu0 0.0
    %1588 = vmatpush1.msra.mxu0 0.0
    %1589 = vmatprep.subr.mxu0 0.0
    %1590 = vmatpush1.msra.mxu0 0.0
    %1591 = vmatprep.subr.mxu0 0.0
    %1592 = vmatpush1.msra.mxu0 0.0
    %1593 = vmatprep.subr.mxu0 0.0
    %1594 = vmatpush1.msra.mxu0 0.0
    %1595 = vmatprep.subr.mxu0 0.0
    %1596 = vmatpush1.msra.mxu0 0.0
    %1597 = vmatprep.subr.mxu0 0.0
    %1598 = vmatpush1.msra.mxu0 0.0
    %1599 = vmatprep.subr.mxu0 0.0
    %1600 = vmatpush1.msra.mxu0 0.0
    %1601 = vmatprep.subr.mxu0 0.0
    %1602 = vmatpush1.msra.mxu0 0.0
    %1603 = vmatprep.subr.mxu0 0.0
    %1604 = vmatpush1.msra.mxu0 0.0
    %1605 = vmatprep.subr.mxu0 0.0
    %1606 = vmatpush1.msra.mxu0 0.0
    %1607 = vmatprep.subr.mxu0 0.0
    %1608 = vmatpush1.msra.mxu0 0.0
    %1609 = vmatprep.subr.mxu0 0.0
    %1610 = vmatpush1.msra.mxu0 0.0
    %1611 = vmatprep.subr.mxu0 0.0
    %1612 = vmatpush1.msra.mxu0 0.0
    %1613 = vmatprep.subr.mxu0 0.0
    %1614 = vmatpush1.msra.mxu0 0.0
    %1615 = vmatprep.mubr.f32.mxu0 0.0
    %1616 = vmatmul.mubr.f32.gmra.mrb[0].mxu0 %v1168
    %v1617 = vpop.f32.mrb[0].mxu0
    %v1618 = vadd.f32 %v1547, %v1617
    %v1619 = vpop.f32.mrb[0].mxu0
    %v1620 = vadd.f32 %v1549, %v1619
    %1621 = vdwg.mxu0
    %1622 = vmatprep.subr.mxu0 0.0
    %1623 = vmatpush1.msra.mxu0 %v1171
    %1624 = vmatprep.subr.mxu0 0.0
    %1625 = vmatpush1.msra.mxu0 %v1174
    %1626 = vmatprep.subr.mxu0 0.0
    %1627 = vmatpush1.msra.mxu0 %v1177
    %1628 = vmatprep.subr.mxu0 0.0
    %1629 = vmatpush1.msra.mxu0 %v1180
    %1630 = vmatprep.subr.mxu0 0.0
    %1631 = vmatpush1.msra.mxu0 %v1183
    %1632 = vmatprep.subr.mxu0 0.0
    %1633 = vmatpush1.msra.mxu0 %v1186
    %1634 = vmatprep.subr.mxu0 0.0
    %1635 = vmatpush1.msra.mxu0 %v1189
    %1636 = vmatprep.subr.mxu0 0.0
    %1637 = vmatpush1.msra.mxu0 %v1192
    %1638 = vmatprep.subr.mxu0 0.0
    %1639 = vmatpush1.msra.mxu0 %v1195
    %1640 = vmatprep.subr.mxu0 0.0
    %1641 = vmatpush1.msra.mxu0 %v1198
    %1642 = vmatprep.subr.mxu0 0.0
    %1643 = vmatpush1.msra.mxu0 %v1201
    %1644 = vmatprep.subr.mxu0 0.0
    %1645 = vmatpush1.msra.mxu0 %v1204
    %1646 = vmatprep.subr.mxu0 0.0
    %1647 = vmatpush1.msra.mxu0 %v1207
    %1648 = vmatprep.subr.mxu0 0.0
    %1649 = vmatpush1.msra.mxu0 %v1210
    %1650 = vmatprep.subr.mxu0 0.0
    %1651 = vmatpush1.msra.mxu0 %v1213
    %1652 = vmatprep.subr.mxu0 0.0
    %1653 = vmatpush1.msra.mxu0 %v1216
    %1654 = vmatprep.subr.mxu0 0.0
    %1655 = vmatpush1.msra.mxu0 %v1219
    %1656 = vmatprep.subr.mxu0 0.0
    %1657 = vmatpush1.msra.mxu0 %v1222
    %1658 = vmatprep.subr.mxu0 0.0
    %1659 = vmatpush1.msra.mxu0 %v1225
    %1660 = vmatprep.subr.mxu0 0.0
    %1661 = vmatpush1.msra.mxu0 %v1228
    %1662 = vmatprep.subr.mxu0 0.0
    %1663 = vmatpush1.msra.mxu0 %v1231
    %1664 = vmatprep.subr.mxu0 0.0
    %1665 = vmatpush1.msra.mxu0 %v1234
    %1666 = vmatprep.subr.mxu0 0.0
    %1667 = vmatpush1.msra.mxu0 %v1237
    %1668 = vmatprep.subr.mxu0 0.0
    %1669 = vmatpush1.msra.mxu0 %v1240
    %1670 = vmatprep.subr.mxu0 0.0
    %1671 = vmatpush1.msra.mxu0 %v1243
    %1672 = vmatprep.subr.mxu0 0.0
    %1673 = vmatpush1.msra.mxu0 %v1246
    %1674 = vmatprep.subr.mxu0 0.0
    %1675 = vmatpush1.msra.mxu0 %v1249
    %1676 = vmatprep.subr.mxu0 0.0
    %1677 = vmatpush1.msra.mxu0 %v1252
    %1678 = vmatprep.subr.mxu0 0.0
    %1679 = vmatpush1.msra.mxu0 %v1255
    %1680 = vmatprep.subr.mxu0 0.0
    %1681 = vmatpush1.msra.mxu0 %v1258
    %1682 = vmatprep.subr.mxu0 0.0
    %1683 = vmatpush1.msra.mxu0 %v1261
    %1684 = vmatprep.subr.mxu0 0.0
    %1685 = vmatpush1.msra.mxu0 %v1264
    %1686 = vmatprep.mubr.f32.mxu0 %v1165
    %1687 = vmatmul.mubr.f32.gmra.mrb[0].mxu0 %v1164
    %v1688 = vpop.f32.mrb[0].mxu0
    %v1689 = vadd.f32 1e-05, %v1688
    %v1690 = vpop.f32.mrb[0].mxu0
    %1691 = vdwg.mxu0
    %1692 = vmatprep.subr.mxu0 0.0
    %1693 = vmatpush1.msra.mxu0 %v1267
    %1694 = vmatprep.subr.mxu0 0.0
    %1695 = vmatpush1.msra.mxu0 %v1270
    %1696 = vmatprep.subr.mxu0 0.0
    %1697 = vmatpush1.msra.mxu0 %v1273
    %1698 = vmatprep.subr.mxu0 0.0
    %1699 = vmatpush1.msra.mxu0 %v1276
    %1700 = vmatprep.subr.mxu0 0.0
    %1701 = vmatpush1.msra.mxu0 %v1279
    %1702 = vmatprep.subr.mxu0 0.0
    %1703 = vmatpush1.msra.mxu0 %v1282
    %1704 = vmatprep.subr.mxu0 0.0
    %1705 = vmatpush1.msra.mxu0 %v1285
    %1706 = vmatprep.subr.mxu0 0.0
    %1707 = vmatpush1.msra.mxu0 %v1288
    %1708 = vmatprep.subr.mxu0 0.0
    %1709 = vmatpush1.msra.mxu0 %v1291
    %1710 = vmatprep.subr.mxu0 0.0
    %1711 = vmatpush1.msra.mxu0 %v1294
    %1712 = vmatprep.subr.mxu0 0.0
    %1713 = vmatpush1.msra.mxu0 %v1297
    %1714 = vmatprep.subr.mxu0 0.0
    %1715 = vmatpush1.msra.mxu0 %v1300
    %1716 = vmatprep.subr.mxu0 0.0
    %1717 = vmatpush1.msra.mxu0 %v1303
    %1718 = vmatprep.subr.mxu0 0.0
    %1719 = vmatpush1.msra.mxu0 %v1306
    %1720 = vmatprep.subr.mxu0 0.0
    %1721 = vmatpush1.msra.mxu0 %v1309
    %1722 = vmatprep.subr.mxu0 0.0
    %1723 = vmatpush1.msra.mxu0 %v1312
    %1724 = vmatprep.subr.mxu0 0.0
    %1725 = vmatpush1.msra.mxu0 %v1315
    %1726 = vmatprep.subr.mxu0 0.0
    %1727 = vmatpush1.msra.mxu0 %v1318
    %1728 = vmatprep.subr.mxu0 0.0
    %1729 = vmatpush1.msra.mxu0 %v1321
    %1730 = vmatprep.subr.mxu0 0.0
    %1731 = vmatpush1.msra.mxu0 %v1324
    %1732 = vmatprep.subr.mxu0 0.0
    %1733 = vmatpush1.msra.mxu0 %v1327
    %1734 = vmatprep.subr.mxu0 0.0
    %1735 = vmatpush1.msra.mxu0 %v1330
    %1736 = vmatprep.subr.mxu0 0.0
    %1737 = vmatpush1.msra.mxu0 %v1333
    %1738 = vmatprep.subr.mxu0 0.0
    %1739 = vmatpush1.msra.mxu0 %v1336
    %1740 = vmatprep.subr.mxu0 0.0
    %1741 = vmatpush1.msra.mxu0 %v1339
    %1742 = vmatprep.subr.mxu0 0.0
    %1743 = vmatpush1.msra.mxu0 %v1342
    %1744 = vmatprep.subr.mxu0 0.0
    %1745 = vmatpush1.msra.mxu0 %v1345
    %1746 = vmatprep.subr.mxu0 0.0
    %1747 = vmatpush1.msra.mxu0 %v1348
    %1748 = vmatprep.subr.mxu0 0.0
    %1749 = vmatpush1.msra.mxu0 %v1351
    %1750 = vmatprep.subr.mxu0 0.0
    %1751 = vmatpush1.msra.mxu0 %v1354
    %1752 = vmatprep.subr.mxu0 0.0
    %1753 = vmatpush1.msra.mxu0 %v1357
    %1754 = vmatprep.subr.mxu0 0.0
    %1755 = vmatpush1.msra.mxu0 %v1360
    %1756 = vmatprep.mubr.f32.mxu0 %v1167
    %1757 = vmatmul.mubr.f32.gmra.mrb[0].mxu0 %v1166
    %v1758 = vpop.f32.mrb[0].mxu0
    %v1759 = vadd.f32 %v1689, %v1758
    %v1760 = vpop.f32.mrb[0].mxu0
    %1761 = vdwg.mxu0
    %1762 = vmatprep.subr.mxu0 0.0
    %1763 = vmatpush1.msra.mxu0 %v1363
    %1764 = vmatprep.subr.mxu0 0.0
    %1765 = vmatpush1.msra.mxu0 %v1366
    %1766 = vmatprep.subr.mxu0 0.0
    %1767 = vmatpush1.msra.mxu0 %v1369
    %1768 = vmatprep.subr.mxu0 0.0
    %1769 = vmatpush1.msra.mxu0 %v1372
    %1770 = vmatprep.subr.mxu0 0.0
    %1771 = vmatpush1.msra.mxu0 %v1375
    %1772 = vmatprep.subr.mxu0 0.0
    %1773 = vmatpush1.msra.mxu0 %v1378
    %1774 = vmatprep.subr.mxu0 0.0
    %1775 = vmatpush1.msra.mxu0 %v1381
    %1776 = vmatprep.subr.mxu0 0.0
    %1777 = vmatpush1.msra.mxu0 %v1384
    %1778 = vmatprep.subr.mxu0 0.0
    %1779 = vmatpush1.msra.mxu0 %v1387
    %1780 = vmatprep.subr.mxu0 0.0
    %1781 = vmatpush1.msra.mxu0 %v1390
    %1782 = vmatprep.subr.mxu0 0.0
    %1783 = vmatpush1.msra.mxu0 %v1393
    %1784 = vmatprep.subr.mxu0 0.0
    %1785 = vmatpush1.msra.mxu0 %v1396
    %1786 = vmatprep.subr.mxu0 0.0
    %1787 = vmatpush1.msra.mxu0 %v1399
    %1788 = vmatprep.subr.mxu0 0.0
    %1789 = vmatpush1.msra.mxu0 %v1402
    %1790 = vmatprep.subr.mxu0 0.0
    %1791 = vmatpush1.msra.mxu0 %v1405
    %1792 = vmatprep.subr.mxu0 0.0
    %1793 = vmatpush1.msra.mxu0 %v1408
    %1794 = vmatprep.subr.mxu0 0.0
    %1795 = vmatpush1.msra.mxu0 0.0
    %1796 = vmatprep.subr.mxu0 0.0
    %1797 = vmatpush1.msra.mxu0 0.0
    %1798 = vmatprep.subr.mxu0 0.0
    %1799 = vmatpush1.msra.mxu0 0.0
    %1800 = vmatprep.subr.mxu0 0.0
    %1801 = vmatpush1.msra.mxu0 0.0
    %1802 = vmatprep.subr.mxu0 0.0
    %1803 = vmatpush1.msra.mxu0 0.0
    %1804 = vmatprep.subr.mxu0 0.0
    %1805 = vmatpush1.msra.mxu0 0.0
    %1806 = vmatprep.subr.mxu0 0.0
    %1807 = vmatpush1.msra.mxu0 0.0
    %1808 = vmatprep.subr.mxu0 0.0
    %1809 = vmatpush1.msra.mxu0 0.0
    %1810 = vmatprep.subr.mxu0 0.0
    %1811 = vmatpush1.msra.mxu0 0.0
    %1812 = vmatprep.subr.mxu0 0.0
    %1813 = vmatpush1.msra.mxu0 0.0
    %1814 = vmatprep.subr.mxu0 0.0
    %1815 = vmatpush1.msra.mxu0 0.0
    %1816 = vmatprep.subr.mxu0 0.0
    %1817 = vmatpush1.msra.mxu0 0.0
    %1818 = vmatprep.subr.mxu0 0.0
    %1819 = vmatpush1.msra.mxu0 0.0
    %1820 = vmatprep.subr.mxu0 0.0
    %1821 = vmatpush1.msra.mxu0 0.0
    %1822 = vmatprep.subr.mxu0 0.0
    %1823 = vmatpush1.msra.mxu0 0.0
    %1824 = vmatprep.subr.mxu0 0.0
    %1825 = vmatpush1.msra.mxu0 0.0
    %1826 = vmatprep.mubr.f32.mxu0 0.0
    %1827 = vmatmul.mubr.f32.gmra.mrb[0].mxu0 %v1168
    %v1828 = vpop.f32.mrb[0].mxu0
    %v1829 = vadd.f32 %v1759, %v1828
    %v1830 = vpop.f32.mrb[0].mxu0
    %1831 = vdwg.mxu0
    %v1832 = vlog2.pop %v1618
    %v1833 = vmul.f32 %v1832, 0.6931472
    %v1834 = vlog2.pop %v1620
    %v1835 = vmul.f32 %v1834, 0.6931472
    %v1836 = vlog2.pop %v1829
    %v1837 = vmul.f32 %v1836, 0.6931472
    %v1838 = vadd.f32 %v1833, 4.5
    %v1839 = vadd.f32 %v1835, 4.5
    %v1840 = vadd.f32 %v1837, 4.5
    %v1841 = vrcp.pop 5.0
    %v1842 = vmul.f32 %v1838, %v1841
    %v1843 = vmul.f32 %v1839, %v1841
    %v1844 = vmul.f32 %v1840, %v1841
    %v1845 = vld [vmem:[%s3] sm:$0xff]
    %v1846 = vld [vmem:[%s3 + $0x8] sm:$0xff]
    %v1847 = vld [vmem:[%s3 + $0x10] sm:$0xff]
    %v1848 = vld [vmem:[%s3 + $0x18] sm:$0xff]
    %v1849 = vld [vmem:[%s3 + $0x20] sm:$0xff]
    %v1850 = vld [vmem:[%s3 + $0x28] sm:$0xff]
    %v1851 = vld [vmem:[%s3 + $0x30] sm:$0xff]
    %v1852 = vld [vmem:[%s3 + $0x38] sm:$0xff]
    %v1853 = vld [vmem:[%s3 + $0x40] sm:$0xff]
    %v1854 = vld [vmem:[%s3 + $0x48] sm:$0xff]
    %v1855 = vld [vmem:[%s3 + $0x50] sm:$0xff]
    %v1856 = vld [vmem:[%s3 + $0x58] sm:$0xff]
    %v1857 = vld [vmem:[%s3 + $0x60] sm:$0xff]
    %v1858 = vld [vmem:[%s3 + $0x68] sm:$0xff]
    %v1859 = vld [vmem:[%s3 + $0x70] sm:$0xff]
    %v1860 = vld [vmem:[%s3 + $0x78] sm:$0xff]
    %v1861 = vld [vmem:[%s3 + $0x80] sm:$0xff]
    %v1862 = vld [vmem:[%s3 + $0x88] sm:$0xff]
    %v1863 = vld [vmem:[%s3 + $0x90] sm:$0xff]
    %v1864 = vld [vmem:[%s3 + $0x98] sm:$0xff]
    %v1865 = vld [vmem:[%s3 + $0xa0] sm:$0xff]
    %v1866 = vld [vmem:[%s3 + $0xa8] sm:$0xff]
    %v1867 = vld [vmem:[%s3 + $0xb0] sm:$0xff]
    %v1868 = vld [vmem:[%s3 + $0xb8] sm:$0xff]
    %v1869 = vld [vmem:[%s3 + $0xc0] sm:$0xff]
    %v1870 = vld [vmem:[%s3 + $0xc8] sm:$0xff]
    %v1871 = vld [vmem:[%s3 + $0xd0] sm:$0xff]
    %v1872 = vld [vmem:[%s3 + $0xd8] sm:$0xff]
    %v1873 = vld [vmem:[%s3 + $0xe0] sm:$0xff]
    %v1874 = vld [vmem:[%s3 + $0xe8] sm:$0xff]
    %v1875 = vld [vmem:[%s3 + $0xf0] sm:$0xff]
    %v1876 = vld [vmem:[%s3 + $0xf8] sm:$0xff]
    %v1877 = vld [vmem:[%s3 + $0x100] sm:$0xff]
    %v1878 = vld [vmem:[%s3 + $0x108] sm:$0xff]
    %v1879 = vld [vmem:[%s3 + $0x110] sm:$0xff]
    %v1880 = vld [vmem:[%s3 + $0x118] sm:$0xff]
    %v1881 = vld [vmem:[%s3 + $0x120] sm:$0xff]
    %v1882 = vld [vmem:[%s3 + $0x128] sm:$0xff]
    %v1883 = vld [vmem:[%s3 + $0x130] sm:$0xff]
    %v1884 = vld [vmem:[%s3 + $0x138] sm:$0xff]
    %v1885 = vld [vmem:[%s3 + $0x140] sm:$0xff]
    %v1886 = vld [vmem:[%s3 + $0x148] sm:$0xff]
    %v1887 = vld [vmem:[%s3 + $0x150] sm:$0xff]
    %v1888 = vld [vmem:[%s3 + $0x158] sm:$0xff]
    %v1889 = vld [vmem:[%s3 + $0x160] sm:$0xff]
    %v1890 = vld [vmem:[%s3 + $0x168] sm:$0xff]
    %v1891 = vld [vmem:[%s3 + $0x170] sm:$0xff]
    %v1892 = vld [vmem:[%s3 + $0x178] sm:$0xff]
    %v1893 = vld [vmem:[#allocation7] sm:$0x1]
    %v1895 = vlaneseq
    %v1896 = vshrl.u32 %v1895, 7
    %v1897 = vsub.s32 0, %v1896
    %v1898 = vrot.slane %v1893, %v1897
    %1900 = vmatprep.subr.mxu0 0.0
    %1901 = vmatpush1.msra.mxu0 %v1845
    %1902 = vmatprep.subr.mxu0 0.0
    %1903 = vmatpush1.msra.mxu0 %v1846
    %1904 = vmatprep.subr.mxu0 0.0
    %1905 = vmatpush1.msra.mxu0 %v1847
    %1906 = vmatprep.subr.mxu0 0.0
    %1907 = vmatpush1.msra.mxu0 %v1848
    %1908 = vmatprep.subr.mxu0 0.0
    %1909 = vmatpush1.msra.mxu0 %v1849
    %1910 = vmatprep.subr.mxu0 0.0
    %1911 = vmatpush1.msra.mxu0 %v1850
    %1912 = vmatprep.subr.mxu0 0.0
    %1913 = vmatpush1.msra.mxu0 %v1851
    %1914 = vmatprep.subr.mxu0 0.0
    %1915 = vmatpush1.msra.mxu0 %v1852
    %1916 = vmatprep.subr.mxu0 0.0
    %1917 = vmatpush1.msra.mxu0 %v1853
    %1918 = vmatprep.subr.mxu0 0.0
    %1919 = vmatpush1.msra.mxu0 %v1854
    %1920 = vmatprep.subr.mxu0 0.0
    %1921 = vmatpush1.msra.mxu0 %v1855
    %1922 = vmatprep.subr.mxu0 0.0
    %1923 = vmatpush1.msra.mxu0 %v1856
    %1924 = vmatprep.subr.mxu0 0.0
    %1925 = vmatpush1.msra.mxu0 %v1857
    %1926 = vmatprep.subr.mxu0 0.0
    %1927 = vmatpush1.msra.mxu0 %v1858
    %1928 = vmatprep.subr.mxu0 0.0
    %1929 = vmatpush1.msra.mxu0 %v1859
    %1930 = vmatprep.subr.mxu0 0.0
    %1931 = vmatpush1.msra.mxu0 %v1860
    %1932 = vmatprep.subr.mxu0 0.0
    %1933 = vmatpush1.msra.mxu0 %v1861
    %1934 = vmatprep.subr.mxu0 0.0
    %1935 = vmatpush1.msra.mxu0 %v1862
    %1936 = vmatprep.subr.mxu0 0.0
    %1937 = vmatpush1.msra.mxu0 %v1863
    %1938 = vmatprep.subr.mxu0 0.0
    %1939 = vmatpush1.msra.mxu0 %v1864
    %1940 = vmatprep.subr.mxu0 0.0
    %1941 = vmatpush1.msra.mxu0 %v1865
    %1942 = vmatprep.subr.mxu0 0.0
    %1943 = vmatpush1.msra.mxu0 %v1866
    %1944 = vmatprep.subr.mxu0 0.0
    %1945 = vmatpush1.msra.mxu0 %v1867
    %1946 = vmatprep.subr.mxu0 0.0
    %1947 = vmatpush1.msra.mxu0 %v1868
    %1948 = vmatprep.subr.mxu0 0.0
    %1949 = vmatpush1.msra.mxu0 %v1869
    %1950 = vmatprep.subr.mxu0 0.0
    %1951 = vmatpush1.msra.mxu0 %v1870
    %1952 = vmatprep.subr.mxu0 0.0
    %1953 = vmatpush1.msra.mxu0 %v1871
    %1954 = vmatprep.subr.mxu0 0.0
    %1955 = vmatpush1.msra.mxu0 %v1872
    %1956 = vmatprep.subr.mxu0 0.0
    %1957 = vmatpush1.msra.mxu0 %v1873
    %1958 = vmatprep.subr.mxu0 0.0
    %1959 = vmatpush1.msra.mxu0 %v1874
    %1960 = vmatprep.subr.mxu0 0.0
    %1961 = vmatpush1.msra.mxu0 %v1875
    %1962 = vmatprep.subr.mxu0 0.0
    %1963 = vmatpush1.msra.mxu0 %v1876
    %1964 = vmatprep.mubr.f32.mxu0 %v1843
    %1965 = vmatmul.mubr.f32.gmra.mrb[0].mxu0 %v1842
    %v1966 = vpop.f32.mrb[0].mxu0
    %v1967 = vadd.f32 %v1898, %v1966
    %v1968 = vpop.f32.mrb[0].mxu0
    %1969 = vdwg.mxu0
    %1970 = vmatprep.subr.mxu0 0.0
    %1971 = vmatpush1.msra.mxu0 %v1877
    %1972 = vmatprep.subr.mxu0 0.0
    %1973 = vmatpush1.msra.mxu0 %v1878
    %1974 = vmatprep.subr.mxu0 0.0
    %1975 = vmatpush1.msra.mxu0 %v1879
    %1976 = vmatprep.subr.mxu0 0.0
    %1977 = vmatpush1.msra.mxu0 %v1880
    %1978 = vmatprep.subr.mxu0 0.0
    %1979 = vmatpush1.msra.mxu0 %v1881
    %1980 = vmatprep.subr.mxu0 0.0
    %1981 = vmatpush1.msra.mxu0 %v1882
    %1982 = vmatprep.subr.mxu0 0.0
    %1983 = vmatpush1.msra.mxu0 %v1883
    %1984 = vmatprep.subr.mxu0 0.0
    %1985 = vmatpush1.msra.mxu0 %v1884
    %1986 = vmatprep.subr.mxu0 0.0
    %1987 = vmatpush1.msra.mxu0 %v1885
    %1988 = vmatprep.subr.mxu0 0.0
    %1989 = vmatpush1.msra.mxu0 %v1886
    %1990 = vmatprep.subr.mxu0 0.0
    %1991 = vmatpush1.msra.mxu0 %v1887
    %1992 = vmatprep.subr.mxu0 0.0
    %1993 = vmatpush1.msra.mxu0 %v1888
    %1994 = vmatprep.subr.mxu0 0.0
    %1995 = vmatpush1.msra.mxu0 %v1889
    %1996 = vmatprep.subr.mxu0 0.0
    %1997 = vmatpush1.msra.mxu0 %v1890
    %1998 = vmatprep.subr.mxu0 0.0
    %1999 = vmatpush1.msra.mxu0 %v1891
    %2000 = vmatprep.subr.mxu0 0.0
    %2001 = vmatpush1.msra.mxu0 %v1892
    %2002 = vmatprep.subr.mxu0 0.0
    %2003 = vmatpush1.msra.mxu0 0.0
    %2004 = vmatprep.subr.mxu0 0.0
    %2005 = vmatpush1.msra.mxu0 0.0
    %2006 = vmatprep.subr.mxu0 0.0
    %2007 = vmatpush1.msra.mxu0 0.0
    %2008 = vmatprep.subr.mxu0 0.0
    %2009 = vmatpush1.msra.mxu0 0.0
    %2010 = vmatprep.subr.mxu0 0.0
    %2011 = vmatpush1.msra.mxu0 0.0
    %2012 = vmatprep.subr.mxu0 0.0
    %2013 = vmatpush1.msra.mxu0 0.0
    %2014 = vmatprep.subr.mxu0 0.0
    %2015 = vmatpush1.msra.mxu0 0.0
    %2016 = vmatprep.subr.mxu0 0.0
    %2017 = vmatpush1.msra.mxu0 0.0
    %2018 = vmatprep.subr.mxu0 0.0
    %2019 = vmatpush1.msra.mxu0 0.0
    %2020 = vmatprep.subr.mxu0 0.0
    %2021 = vmatpush1.msra.mxu0 0.0
    %2022 = vmatprep.subr.mxu0 0.0
    %2023 = vmatpush1.msra.mxu0 0.0
    %2024 = vmatprep.subr.mxu0 0.0
    %2025 = vmatpush1.msra.mxu0 0.0
    %2026 = vmatprep.subr.mxu0 0.0
    %2027 = vmatpush1.msra.mxu0 0.0
    %2028 = vmatprep.subr.mxu0 0.0
    %2029 = vmatpush1.msra.mxu0 0.0
    %2030 = vmatprep.subr.mxu0 0.0
    %2031 = vmatpush1.msra.mxu0 0.0
    %2032 = vmatprep.subr.mxu0 0.0
    %2033 = vmatpush1.msra.mxu0 0.0
    %2034 = vmatprep.mubr.f32.mxu0 0.0
    %2035 = vmatmul.mubr.f32.gmra.mrb[0].mxu0 %v1844
    %v2036 = vpop.f32.mrb[0].mxu0
    %v2037 = vadd.f32 %v1967, %v2036
    %v2038 = vpop.f32.mrb[0].mxu0
    %2039 = vdwg.mxu0
    %vm2040 = vcmask 58368
    %2041 = vst.msk [vmem:[#allocation8] sm:$0x3] %vm2040, %v2037
    // Predicated region
    $region34: #{passt_forward.1} parent=1 // pred_check
      _
    $region35: #{passt_forward.1} parent=1 // pred_check_branch
      %2043 = sbr.rel (0) target = $region37
    $region36: #{passt_forward.1} parent=1 // pred_region
      %s2045 = ssub.s32 32, 32
      %2046 = vsyncadd [#allocation4], %s2045
      %s2048 = sshll.u32 [#allocation8], 4
      %s2049 = int_to_ptr.vmem [resolvable:$true] %s2048
      %2051 = dma.vmem_to_hbm [thread:$0]  %s2049, 32, %s5, [#allocation4]
    $region37: #{passt_forward.1} parent=1 // pred_fallthru
      _
    // Predicated region
    $region38: #{passt_forward.1} parent=1 // pred_check
      _
    $region39: #{passt_forward.1} parent=1 // pred_check_branch
      %2053 = sbr.rel (0) target = $region41
    $region40: #{passt_forward.1} parent=1 // pred_region
      %2054 = dma.done [#allocation4], 32
    $region41: #{passt_forward.1} parent=1 // pred_fallthru
      _
    %2055 = vsyncpa [#allocation3], 1
    %2056 = vsyncpa [#allocation6], 1
    %2057 = vsyncpa [#allocation4], 1

</llo_original>
